<compile_context>
chip_gen: v5e
topology: v5e:2x2
jax: 0.10.0
libtpu: 0.0.40
codegen_flags: <defaults>
</compile_context>

<pallas_src>
import functools

import jax
import jax.numpy as jnp
from jax.experimental import pallas as pl
from jax.experimental.pallas import tpu as pltpu


def densenet_kernel(x_ref,
                    w1_ref, b1_ref,
                    w2_ref, b2_ref,
                    w3_ref, b3_ref,
                    w4_ref, b4_ref,
                    w5_ref, b5_ref,
                    o_ref):
    # Linear(inputsize, 256) + ReLU   (bf16 operands, f32 accumulate)
    h = jnp.dot(x_ref[...], w1_ref[...], preferred_element_type=jnp.float32)
    h = jnp.maximum(h + b1_ref[...], 0.0)
    # Linear(256, 512) + ReLU
    h = jnp.dot(h.astype(jnp.bfloat16), w2_ref[...], preferred_element_type=jnp.float32)
    h = jnp.maximum(h + b2_ref[...], 0.0)
    # Linear(512, 512) + ReLU
    h = jnp.dot(h.astype(jnp.bfloat16), w3_ref[...], preferred_element_type=jnp.float32)
    h = jnp.maximum(h + b3_ref[...], 0.0)
    # Linear(512, 256) + ReLU
    h = jnp.dot(h.astype(jnp.bfloat16), w4_ref[...], preferred_element_type=jnp.float32)
    h = jnp.maximum(h + b4_ref[...], 0.0)
    # Linear(256, outputsize)  (no activation)
    h = jnp.dot(h.astype(jnp.bfloat16), w5_ref[...], preferred_element_type=jnp.float32)
    o_ref[...] = (h + b5_ref[...]).astype(o_ref.dtype)


def _round_up(n, m):
    return ((n + m - 1) // m) * m


def _pad2d(a, rows, cols):
    r, c = a.shape
    if r == rows and c == cols:
        return a
    return jnp.pad(a, ((0, rows - r), (0, cols - c)))


def _const_spec(shape):
    # Weight / bias block: full array, same block every grid step -> VMEM-resident.
    return pl.BlockSpec(shape, lambda i: (0, 0))


@functools.partial(jax.jit, static_argnames=("bt",))
def densenet_forward(x, params, *, bt=256):
    """x: (batch, inputsize) f32; params: list of (W, b) with W (in, out) f32, b (1, out) f32."""
    batch, in_size = x.shape
    out_size = params[-1][0].shape[1]

    # Lane-pad ragged dims; sublane-pad / tile the batch dim.
    in_p = _round_up(in_size, 128)
    out_p = _round_up(out_size, 128)
    bt_eff = min(bt, _round_up(batch, 8))
    batch_p = _round_up(batch, bt_eff)
    grid = (batch_p // bt_eff,)

    # Activations / weights enter the MXU as bf16; zero-padding keeps results exact.
    x_p = _pad2d(x, batch_p, in_p).astype(jnp.bfloat16)

    (w1, b1), (w2, b2), (w3, b3), (w4, b4), (w5, b5) = params
    w1_p = _pad2d(w1, in_p, w1.shape[1]).astype(jnp.bfloat16)
    w2_p = w2.astype(jnp.bfloat16)
    w3_p = w3.astype(jnp.bfloat16)
    w4_p = w4.astype(jnp.bfloat16)
    w5_p = _pad2d(w5, w5.shape[0], out_p).astype(jnp.bfloat16)
    b5_p = _pad2d(b5, 1, out_p)  # biases stay f32 (added in f32)

    flat_args = [x_p,
                 w1_p, b1, w2_p, b2, w3_p, b3, w4_p, b4, w5_p, b5_p]

    in_specs = [pl.BlockSpec((bt_eff, in_p), lambda i: (i, 0))]
    in_specs += [_const_spec(a.shape) for a in flat_args[1:]]

    out_p_arr = pl.pallas_call(
        densenet_kernel,
        out_shape=jax.ShapeDtypeStruct((batch_p, out_p), jnp.float32),
        grid_spec=pltpu.PrefetchScalarGridSpec(
            num_scalar_prefetch=0,
            grid=grid,
            in_specs=in_specs,
            out_specs=pl.BlockSpec((bt_eff, out_p), lambda i: (i, 0)),
        ),
        compiler_params=pltpu.CompilerParams(
            dimension_semantics=("parallel",),
            vmem_limit_bytes=64 * 1024 * 1024,
        ),
    )(*flat_args)

    # Strip batch / lane padding.
    return out_p_arr[:batch, :out_size]


def init_params(key, inputsize, outputsize):
    """Deterministic init matching nn.Linear's U(-1/sqrt(fan_in), 1/sqrt(fan_in))."""
    dims = [(inputsize, 256), (256, 512), (512, 512), (512, 256), (256, outputsize)]
    params = []
    for (fan_in, fan_out) in dims:
        key, kw, kb = jax.random.split(key, 3)
        bound = 1.0 / jnp.sqrt(jnp.float32(fan_in))
        w = jax.random.uniform(kw, (fan_in, fan_out), jnp.float32, -bound, bound)
        b = jax.random.uniform(kb, (1, fan_out), jnp.float32, -bound, bound)
        params.append((w, b))
    return params


def reference_forward_bf16(x, params):
    """Same numerics as the kernel: bf16 matmul operands, f32 accumulation/bias/ReLU."""
    h = x.astype(jnp.bfloat16)
    n = len(params)
    for i, (w, b) in enumerate(params):
        h = jnp.dot(h, w.astype(jnp.bfloat16), preferred_element_type=jnp.float32) + b
        if i < n - 1:
            h = jnp.maximum(h, 0.0).astype(jnp.bfloat16)
    return h


def reference_forward_f32(x, params):
    h = x
    n = len(params)
    for i, (w, b) in enumerate(params):
        h = h @ w + b
        if i < n - 1:
            h = jnp.maximum(h, 0.0)
    return h


if __name__ == "__main__":
    key = jax.random.PRNGKey(0)
    batch, inputsize, outputsize = 8, 32, 8

    key, kx = jax.random.split(key)
    x = jax.random.normal(kx, (batch, inputsize), jnp.float32)
    params = init_params(key, inputsize, outputsize)

    out = densenet_forward(x, params)
    out = jax.block_until_ready(out)
    assert out.shape == (batch, outputsize)

    # Bit-level check vs a reference with identical bf16/f32 mixed precision.
    ref_bf16 = reference_forward_bf16(x, params)
    assert jnp.allclose(out, ref_bf16, atol=1e-2, rtol=1e-2), "mismatch vs bf16 reference"

    # Loose check vs the pure-f32 PyTorch-equivalent forward (bf16 drift expected).
    ref_f32 = reference_forward_f32(x, params)
    assert jnp.allclose(out, ref_f32, atol=5e-2, rtol=5e-2), "mismatch vs f32 reference"

    print("KERNEL_OK")
</pallas_src>

<mosaic_0001>
module attributes {stable_mosaic.version = 11 : i64} {
  func.func @densenet_kernel(%arg0: i32, %arg1: memref<8x128xbf16, #tpu.memory_space<vmem>>, %arg2: memref<128x256xbf16, #tpu.memory_space<vmem>>, %arg3: memref<1x256xf32, #tpu.memory_space<vmem>>, %arg4: memref<256x512xbf16, #tpu.memory_space<vmem>>, %arg5: memref<1x512xf32, #tpu.memory_space<vmem>>, %arg6: memref<512x512xbf16, #tpu.memory_space<vmem>>, %arg7: memref<1x512xf32, #tpu.memory_space<vmem>>, %arg8: memref<512x256xbf16, #tpu.memory_space<vmem>>, %arg9: memref<1x256xf32, #tpu.memory_space<vmem>>, %arg10: memref<256x128xbf16, #tpu.memory_space<vmem>>, %arg11: memref<1x128xf32, #tpu.memory_space<vmem>>, %arg12: memref<8x128xf32, #tpu.memory_space<vmem>>) attributes {dimension_semantics = [#tpu.dimension_semantics<parallel>], iteration_bounds = array<i64: 1>, scalar_prefetch = 0 : i64, scratch_operands = 0 : i64, tpu.core_type = #tpu.core_type<tc>, window_params = [{transform_indices = @transform_0, window_bounds = array<i64: 8, 128>}, {pipeline_mode = #tpu.pipeline_mode<synchronous>, transform_indices = @transform_1, window_bounds = array<i64: 128, 256>}, {pipeline_mode = #tpu.pipeline_mode<synchronous>, transform_indices = @transform_2, window_bounds = array<i64: 1, 256>}, {pipeline_mode = #tpu.pipeline_mode<synchronous>, transform_indices = @transform_3, window_bounds = array<i64: 256, 512>}, {pipeline_mode = #tpu.pipeline_mode<synchronous>, transform_indices = @transform_4, window_bounds = array<i64: 1, 512>}, {pipeline_mode = #tpu.pipeline_mode<synchronous>, transform_indices = @transform_5, window_bounds = array<i64: 512, 512>}, {pipeline_mode = #tpu.pipeline_mode<synchronous>, transform_indices = @transform_6, window_bounds = array<i64: 1, 512>}, {pipeline_mode = #tpu.pipeline_mode<synchronous>, transform_indices = @transform_7, window_bounds = array<i64: 512, 256>}, {pipeline_mode = #tpu.pipeline_mode<synchronous>, transform_indices = @transform_8, window_bounds = array<i64: 1, 256>}, {pipeline_mode = #tpu.pipeline_mode<synchronous>, transform_indices = @transform_9, window_bounds = array<i64: 256, 128>}, {pipeline_mode = #tpu.pipeline_mode<synchronous>, transform_indices = @transform_10, window_bounds = array<i64: 1, 128>}, {transform_indices = @transform_11, window_bounds = array<i64: 8, 128>}]} {
    %c0 = arith.constant 0 : index
    %c0_0 = arith.constant 0 : index
    %0 = vector.load %arg1[%c0, %c0_0] : memref<8x128xbf16, #tpu.memory_space<vmem>>, vector<8x128xbf16>
    %c0_1 = arith.constant 0 : index
    %c0_2 = arith.constant 0 : index
    %1 = vector.load %arg2[%c0_1, %c0_2] : memref<128x256xbf16, #tpu.memory_space<vmem>>, vector<128x256xbf16>
    %cst = arith.constant dense<0.000000e+00> : vector<8x256xf32>
    %2 = tpu.matmul %0, %1, %cst {dimension_numbers = #tpu.dot_dimension_numbers<[1], [0], [0], [1], [0, 0, 1, 1], [], []>} : vector<8x128xbf16>, vector<128x256xbf16>, vector<8x256xf32> -> vector<8x256xf32>
    %c0_3 = arith.constant 0 : index
    %c0_4 = arith.constant 0 : index
    %3 = vector.load %arg3[%c0_3, %c0_4] : memref<1x256xf32, #tpu.memory_space<vmem>>, vector<1x256xf32>
    %4 = vector.broadcast %3 : vector<1x256xf32> to vector<8x256xf32>
    %5 = arith.addf %2, %4 : vector<8x256xf32>
    %cst_5 = arith.constant 0.000000e+00 : f32
    %6 = vector.broadcast %cst_5 : f32 to vector<8x256xf32>
    %7 = arith.maximumf %5, %6 : vector<8x256xf32>
    %8 = arith.truncf %7 : vector<8x256xf32> to vector<8x256xbf16>
    %c0_6 = arith.constant 0 : index
    %c0_7 = arith.constant 0 : index
    %9 = vector.load %arg4[%c0_6, %c0_7] : memref<256x512xbf16, #tpu.memory_space<vmem>>, vector<256x512xbf16>
    %cst_8 = arith.constant dense<0.000000e+00> : vector<8x512xf32>
    %10 = tpu.matmul %8, %9, %cst_8 {dimension_numbers = #tpu.dot_dimension_numbers<[1], [0], [0], [1], [0, 0, 1, 1], [], []>} : vector<8x256xbf16>, vector<256x512xbf16>, vector<8x512xf32> -> vector<8x512xf32>
    %c0_9 = arith.constant 0 : index
    %c0_10 = arith.constant 0 : index
    %11 = vector.load %arg5[%c0_9, %c0_10] : memref<1x512xf32, #tpu.memory_space<vmem>>, vector<1x512xf32>
    %12 = vector.broadcast %11 : vector<1x512xf32> to vector<8x512xf32>
    %13 = arith.addf %10, %12 : vector<8x512xf32>
    %cst_11 = arith.constant 0.000000e+00 : f32
    %14 = vector.broadcast %cst_11 : f32 to vector<8x512xf32>
    %15 = arith.maximumf %13, %14 : vector<8x512xf32>
    %16 = arith.truncf %15 : vector<8x512xf32> to vector<8x512xbf16>
    %c0_12 = arith.constant 0 : index
    %c0_13 = arith.constant 0 : index
    %17 = vector.load %arg6[%c0_12, %c0_13] : memref<512x512xbf16, #tpu.memory_space<vmem>>, vector<512x512xbf16>
    %cst_14 = arith.constant dense<0.000000e+00> : vector<8x512xf32>
    %18 = tpu.matmul %16, %17, %cst_14 {dimension_numbers = #tpu.dot_dimension_numbers<[1], [0], [0], [1], [0, 0, 1, 1], [], []>} : vector<8x512xbf16>, vector<512x512xbf16>, vector<8x512xf32> -> vector<8x512xf32>
    %c0_15 = arith.constant 0 : index
    %c0_16 = arith.constant 0 : index
    %19 = vector.load %arg7[%c0_15, %c0_16] : memref<1x512xf32, #tpu.memory_space<vmem>>, vector<1x512xf32>
    %20 = vector.broadcast %19 : vector<1x512xf32> to vector<8x512xf32>
    %21 = arith.addf %18, %20 : vector<8x512xf32>
    %cst_17 = arith.constant 0.000000e+00 : f32
    %22 = vector.broadcast %cst_17 : f32 to vector<8x512xf32>
    %23 = arith.maximumf %21, %22 : vector<8x512xf32>
    %24 = arith.truncf %23 : vector<8x512xf32> to vector<8x512xbf16>
    %c0_18 = arith.constant 0 : index
    %c0_19 = arith.constant 0 : index
    %25 = vector.load %arg8[%c0_18, %c0_19] : memref<512x256xbf16, #tpu.memory_space<vmem>>, vector<512x256xbf16>
    %cst_20 = arith.constant dense<0.000000e+00> : vector<8x256xf32>
    %26 = tpu.matmul %24, %25, %cst_20 {dimension_numbers = #tpu.dot_dimension_numbers<[1], [0], [0], [1], [0, 0, 1, 1], [], []>} : vector<8x512xbf16>, vector<512x256xbf16>, vector<8x256xf32> -> vector<8x256xf32>
    %c0_21 = arith.constant 0 : index
    %c0_22 = arith.constant 0 : index
    %27 = vector.load %arg9[%c0_21, %c0_22] : memref<1x256xf32, #tpu.memory_space<vmem>>, vector<1x256xf32>
    %28 = vector.broadcast %27 : vector<1x256xf32> to vector<8x256xf32>
    %29 = arith.addf %26, %28 : vector<8x256xf32>
    %cst_23 = arith.constant 0.000000e+00 : f32
    %30 = vector.broadcast %cst_23 : f32 to vector<8x256xf32>
    %31 = arith.maximumf %29, %30 : vector<8x256xf32>
    %32 = arith.truncf %31 : vector<8x256xf32> to vector<8x256xbf16>
    %c0_24 = arith.constant 0 : index
    %c0_25 = arith.constant 0 : index
    %33 = vector.load %arg10[%c0_24, %c0_25] : memref<256x128xbf16, #tpu.memory_space<vmem>>, vector<256x128xbf16>
    %cst_26 = arith.constant dense<0.000000e+00> : vector<8x128xf32>
    %34 = tpu.matmul %32, %33, %cst_26 {dimension_numbers = #tpu.dot_dimension_numbers<[1], [0], [0], [1], [0, 0, 1, 1], [], []>} : vector<8x256xbf16>, vector<256x128xbf16>, vector<8x128xf32> -> vector<8x128xf32>
    %c0_27 = arith.constant 0 : index
    %c0_28 = arith.constant 0 : index
    %35 = vector.load %arg11[%c0_27, %c0_28] : memref<1x128xf32, #tpu.memory_space<vmem>>, vector<1x128xf32>
    %36 = vector.broadcast %35 : vector<1x128xf32> to vector<8x128xf32>
    %37 = arith.addf %34, %36 : vector<8x128xf32>
    %c0_29 = arith.constant 0 : index
    %c0_30 = arith.constant 0 : index
    %38 = vector.load %arg12[%c0_29, %c0_30] : memref<8x128xf32, #tpu.memory_space<vmem>>, vector<8x128xf32>
    tpu.vector_store %arg12[%c0_29, %c0_30], %37 {strides = array<i32>} : memref<8x128xf32, #tpu.memory_space<vmem>>, vector<8x128xf32>,
    return
  }
  func.func @transform_0(%arg0: i32) -> (i32, i32) {
    %c0_i32 = arith.constant 0 : i32
    %c0_i32_0 = arith.constant 0 : i32
    return %arg0, %c0_i32 : i32, i32
  }
  func.func @transform_1(%arg0: i32) -> (i32, i32) {
    %c0_i32 = arith.constant 0 : i32
    %c0_i32_0 = arith.constant 0 : i32
    %c0_i32_1 = arith.constant 0 : i32
    return %c0_i32, %c0_i32_0 : i32, i32
  }
  func.func @transform_2(%arg0: i32) -> (i32, i32) {
    %c0_i32 = arith.constant 0 : i32
    %c0_i32_0 = arith.constant 0 : i32
    %c0_i32_1 = arith.constant 0 : i32
    return %c0_i32, %c0_i32_0 : i32, i32
  }
  func.func @transform_3(%arg0: i32) -> (i32, i32) {
    %c0_i32 = arith.constant 0 : i32
    %c0_i32_0 = arith.constant 0 : i32
    %c0_i32_1 = arith.constant 0 : i32
    return %c0_i32, %c0_i32_0 : i32, i32
  }
  func.func @transform_4(%arg0: i32) -> (i32, i32) {
    %c0_i32 = arith.constant 0 : i32
    %c0_i32_0 = arith.constant 0 : i32
    %c0_i32_1 = arith.constant 0 : i32
    return %c0_i32, %c0_i32_0 : i32, i32
  }
  func.func @transform_5(%arg0: i32) -> (i32, i32) {
    %c0_i32 = arith.constant 0 : i32
    %c0_i32_0 = arith.constant 0 : i32
    %c0_i32_1 = arith.constant 0 : i32
    return %c0_i32, %c0_i32_0 : i32, i32
  }
  func.func @transform_6(%arg0: i32) -> (i32, i32) {
    %c0_i32 = arith.constant 0 : i32
    %c0_i32_0 = arith.constant 0 : i32
    %c0_i32_1 = arith.constant 0 : i32
    return %c0_i32, %c0_i32_0 : i32, i32
  }
  func.func @transform_7(%arg0: i32) -> (i32, i32) {
    %c0_i32 = arith.constant 0 : i32
    %c0_i32_0 = arith.constant 0 : i32
    %c0_i32_1 = arith.constant 0 : i32
    return %c0_i32, %c0_i32_0 : i32, i32
  }
  func.func @transform_8(%arg0: i32) -> (i32, i32) {
    %c0_i32 = arith.constant 0 : i32
    %c0_i32_0 = arith.constant 0 : i32
    %c0_i32_1 = arith.constant 0 : i32
    return %c0_i32, %c0_i32_0 : i32, i32
  }
  func.func @transform_9(%arg0: i32) -> (i32, i32) {
    %c0_i32 = arith.constant 0 : i32
    %c0_i32_0 = arith.constant 0 : i32
    %c0_i32_1 = arith.constant 0 : i32
    return %c0_i32, %c0_i32_0 : i32, i32
  }
  func.func @transform_10(%arg0: i32) -> (i32, i32) {
    %c0_i32 = arith.constant 0 : i32
    %c0_i32_0 = arith.constant 0 : i32
    %c0_i32_1 = arith.constant 0 : i32
    return %c0_i32, %c0_i32_0 : i32, i32
  }
  func.func @transform_11(%arg0: i32) -> (i32, i32) {
    %c0_i32 = arith.constant 0 : i32
    %c0_i32_0 = arith.constant 0 : i32
    return %arg0, %c0_i32 : i32, i32
  }
}

</mosaic_0001>

<llo_original>
// kernel: densenet_forward.1
$region0: #{densenet_forward.1}
  #allocation0 [shape = 'u32[]', space=smem, size = 0x4, offset = 0x4, fixed_abs, tag = 'smem constant byte address 0x4 - core index']
  #allocation1 [shape = 'u32[72,128]{1,0:T(1,128)}', space=vmem, size = 0x9000, scoped, tag = 'internal scratch']
  %s0 = inlined_call_operand.vmem [shape: bf16[8,128], index: 0, kind: input, shape index: {}]
  %s1 = inlined_call_operand.vmem [shape: bf16[128,256], index: 1, kind: input, shape index: {}]
  %s2 = inlined_call_operand.vmem [shape: f32[1,256], index: 2, kind: input, shape index: {}]
  %s3 = inlined_call_operand.vmem [shape: bf16[256,512], index: 3, kind: input, shape index: {}]
  %s4 = inlined_call_operand.vmem [shape: f32[1,512], index: 4, kind: input, shape index: {}]
  %s5 = inlined_call_operand.vmem [shape: bf16[512,512], index: 5, kind: input, shape index: {}]
  %s6 = inlined_call_operand.vmem [shape: f32[1,512], index: 6, kind: input, shape index: {}]
  %s7 = inlined_call_operand.vmem [shape: bf16[512,256], index: 7, kind: input, shape index: {}]
  %s8 = inlined_call_operand.vmem [shape: f32[1,256], index: 8, kind: input, shape index: {}]
  %s9 = inlined_call_operand.vmem [shape: bf16[256,128], index: 9, kind: input, shape index: {}]
  %s10 = inlined_call_operand.vmem [shape: f32[1,128], index: 10, kind: input, shape index: {}]
  %s11 = inlined_call_operand.hbm [shape: f32[8,128], index: 11, kind: output, shape index: {}]
  %s12 = sld [smem:[#allocation0]]
  $region54: #{densenet_forward.1} parent=0
    _
  %s14 = ssub.s32 1, %s12
  %s15 = scalar_select 0, %s14, %s12
  $region1: #{densenet_forward.1} parent=0
    #allocation2 [shape = 'u8[4096]{0}', space=vmem, size = 0x1000, scoped, tag = 'output window, operand 0, single buffered']
    #allocation3 [shape = 's32[1]{0}', space=sflag, size = 0x4, scoped, tag = 'scoped memory for densenet_forward.1']
    %16 = vsyncpa [#allocation3], 0
    // Predicated region
    $region2: #{densenet_forward.1} parent=1 // pred_check
      _
    $region3: #{densenet_forward.1} parent=1 // pred_check_branch
      %18 = sbr.rel (0) target = $region5
    $region4: #{densenet_forward.1} parent=1 // pred_region
      _
    $region5: #{densenet_forward.1} parent=1 // pred_fallthru
      _
    // Predicated region
    $region6: #{densenet_forward.1} parent=1 // pred_check
      _
    $region7: #{densenet_forward.1} parent=1 // pred_check_branch
      %20 = sbr.rel (0) target = $region9
    $region8: #{densenet_forward.1} parent=1 // pred_region
      _
    $region9: #{densenet_forward.1} parent=1 // pred_fallthru
      _
    // Predicated region
    $region10: #{densenet_forward.1} parent=1 // pred_check
      _
    $region11: #{densenet_forward.1} parent=1 // pred_check_branch
      %22 = sbr.rel (0) target = $region13
    $region12: #{densenet_forward.1} parent=1 // pred_region
      _
    $region13: #{densenet_forward.1} parent=1 // pred_fallthru
      _
    // Predicated region
    $region14: #{densenet_forward.1} parent=1 // pred_check
      _
    $region15: #{densenet_forward.1} parent=1 // pred_check_branch
      %24 = sbr.rel (0) target = $region17
    $region16: #{densenet_forward.1} parent=1 // pred_region
      _
    $region17: #{densenet_forward.1} parent=1 // pred_fallthru
      _
    // Predicated region
    $region18: #{densenet_forward.1} parent=1 // pred_check
      _
    $region19: #{densenet_forward.1} parent=1 // pred_check_branch
      %26 = sbr.rel (0) target = $region21
    $region20: #{densenet_forward.1} parent=1 // pred_region
      _
    $region21: #{densenet_forward.1} parent=1 // pred_fallthru
      _
    // Predicated region
    $region22: #{densenet_forward.1} parent=1 // pred_check
      _
    $region23: #{densenet_forward.1} parent=1 // pred_check_branch
      %28 = sbr.rel (0) target = $region25
    $region24: #{densenet_forward.1} parent=1 // pred_region
      _
    $region25: #{densenet_forward.1} parent=1 // pred_fallthru
      _
    // Predicated region
    $region26: #{densenet_forward.1} parent=1 // pred_check
      _
    $region27: #{densenet_forward.1} parent=1 // pred_check_branch
      %30 = sbr.rel (0) target = $region29
    $region28: #{densenet_forward.1} parent=1 // pred_region
      _
    $region29: #{densenet_forward.1} parent=1 // pred_fallthru
      _
    // Predicated region
    $region30: #{densenet_forward.1} parent=1 // pred_check
      _
    $region31: #{densenet_forward.1} parent=1 // pred_check_branch
      %32 = sbr.rel (0) target = $region33
    $region32: #{densenet_forward.1} parent=1 // pred_region
      _
    $region33: #{densenet_forward.1} parent=1 // pred_fallthru
      _
    // Predicated region
    $region34: #{densenet_forward.1} parent=1 // pred_check
      _
    $region35: #{densenet_forward.1} parent=1 // pred_check_branch
      %34 = sbr.rel (0) target = $region37
    $region36: #{densenet_forward.1} parent=1 // pred_region
      _
    $region37: #{densenet_forward.1} parent=1 // pred_fallthru
      _
    // Predicated region
    $region38: #{densenet_forward.1} parent=1 // pred_check
      _
    $region39: #{densenet_forward.1} parent=1 // pred_check_branch
      %36 = sbr.rel (0) target = $region41
    $region40: #{densenet_forward.1} parent=1 // pred_region
      _
    $region41: #{densenet_forward.1} parent=1 // pred_fallthru
      _
    // Predicated region
    $region42: #{densenet_forward.1} parent=1 // pred_check
      _
    $region43: #{densenet_forward.1} parent=1 // pred_check_branch
      %38 = sbr.rel (0) target = $region45
    $region44: #{densenet_forward.1} parent=1 // pred_region
      _
    $region45: #{densenet_forward.1} parent=1 // pred_fallthru
      _
    %v39 = vld [vmem:[%s0] sm:$0xf]
    %v40 = vld [vmem:[%s1] sm:$0xff]
    %v41 = vld [vmem:[%s1 + $0x8] sm:$0xff]
    %v42 = vld [vmem:[%s1 + $0x10] sm:$0xff]
    %v43 = vld [vmem:[%s1 + $0x18] sm:$0xff]
    %v44 = vld [vmem:[%s1 + $0x20] sm:$0xff]
    %v45 = vld [vmem:[%s1 + $0x28] sm:$0xff]
    %v46 = vld [vmem:[%s1 + $0x30] sm:$0xff]
    %v47 = vld [vmem:[%s1 + $0x38] sm:$0xff]
    %v48 = vld [vmem:[%s1 + $0x40] sm:$0xff]
    %v49 = vld [vmem:[%s1 + $0x48] sm:$0xff]
    %v50 = vld [vmem:[%s1 + $0x50] sm:$0xff]
    %v51 = vld [vmem:[%s1 + $0x58] sm:$0xff]
    %v52 = vld [vmem:[%s1 + $0x60] sm:$0xff]
    %v53 = vld [vmem:[%s1 + $0x68] sm:$0xff]
    %v54 = vld [vmem:[%s1 + $0x70] sm:$0xff]
    %v55 = vld [vmem:[%s1 + $0x78] sm:$0xff]
    %v56 = vld [vmem:[%s2] sm:$0x3]
    %v58 = vperm.slane %v56, 0
    %v59 = vperm.slane %v56, 1
    %v78 = vunpack.c.l.b16 %v40
    %v79 = vunpack.c.h.b16 %v40
    %v80 = vunpack.c.l.b16 %v41
    %v81 = vunpack.c.h.b16 %v41
    %v82 = vunpack.c.l.b16 %v42
    %v83 = vunpack.c.h.b16 %v42
    %v84 = vunpack.c.l.b16 %v43
    %v85 = vunpack.c.h.b16 %v43
    %v86 = vunpack.c.l.b16 %v44
    %v87 = vunpack.c.h.b16 %v44
    %v88 = vunpack.c.l.b16 %v45
    %v89 = vunpack.c.h.b16 %v45
    %v90 = vunpack.c.l.b16 %v46
    %v91 = vunpack.c.h.b16 %v46
    %v92 = vunpack.c.l.b16 %v47
    %v93 = vunpack.c.h.b16 %v47
    %v94 = vunpack.c.l.b16 %v48
    %v95 = vunpack.c.h.b16 %v48
    %v96 = vunpack.c.l.b16 %v49
    %v97 = vunpack.c.h.b16 %v49
    %v98 = vunpack.c.l.b16 %v50
    %v99 = vunpack.c.h.b16 %v50
    %v100 = vunpack.c.l.b16 %v51
    %v101 = vunpack.c.h.b16 %v51
    %v102 = vunpack.c.l.b16 %v52
    %v103 = vunpack.c.h.b16 %v52
    %v104 = vunpack.c.l.b16 %v53
    %v105 = vunpack.c.h.b16 %v53
    %v106 = vunpack.c.l.b16 %v54
    %v107 = vunpack.c.h.b16 %v54
    %v108 = vunpack.c.l.b16 %v55
    %v109 = vunpack.c.h.b16 %v55
    %v110 = vpack.c.b16 %v80, %v78
    %v111 = vpack.c.b16 %v81, %v79
    %v112 = vpack.c.b16 %v84, %v82
    %v113 = vpack.c.b16 %v85, %v83
    %v114 = vpack.c.b16 %v88, %v86
    %v115 = vpack.c.b16 %v89, %v87
    %v116 = vpack.c.b16 %v92, %v90
    %v117 = vpack.c.b16 %v93, %v91
    %v118 = vpack.c.b16 %v96, %v94
    %v119 = vpack.c.b16 %v97, %v95
    %v120 = vpack.c.b16 %v100, %v98
    %v121 = vpack.c.b16 %v101, %v99
    %v122 = vpack.c.b16 %v104, %v102
    %v123 = vpack.c.b16 %v105, %v103
    %v124 = vpack.c.b16 %v108, %v106
    %v125 = vpack.c.b16 %v109, %v107
    %142 = vmatpush.bf16.msra.mxu0 %v124
    %143 = vmatpush.bf16.msra.mxu0 %v122
    %144 = vmatpush.bf16.msra.mxu0 %v120
    %145 = vmatpush.bf16.msra.mxu0 %v118
    %146 = vmatpush.bf16.msra.mxu0 %v116
    %147 = vmatpush.bf16.msra.mxu0 %v114
    %148 = vmatpush.bf16.msra.mxu0 %v112
    %149 = vmatpush.bf16.msra.mxu0 %v110
    %150 = vmatmul.bf16.gmra.mxu0 %v39
    %v151 = vpop.f32.mrf.mxu0
    %v152 = vadd.f32 %v58, %v151
    %v153 = vpop.f32.mrf.mxu0
    %154 = vdwg.mxu0
    %155 = vmatpush.bf16.msra.mxu0 %v125
    %156 = vmatpush.bf16.msra.mxu0 %v123
    %157 = vmatpush.bf16.msra.mxu0 %v121
    %158 = vmatpush.bf16.msra.mxu0 %v119
    %159 = vmatpush.bf16.msra.mxu0 %v117
    %160 = vmatpush.bf16.msra.mxu0 %v115
    %161 = vmatpush.bf16.msra.mxu0 %v113
    %162 = vmatpush.bf16.msra.mxu0 %v111
    %163 = vmatmul.bf16.gmra.mxu0 %v39
    %v164 = vpop.f32.mrf.mxu0
    %v165 = vadd.f32 %v59, %v164
    %v166 = vpop.f32.mrf.mxu0
    %167 = vdwg.mxu0
    %v168 = vmax.f32 %v152, 0.0
    %v169 = vmax.f32 %v165, 0.0
    %v170 = vpack.c.bf16 %v168, %v168
    %v171 = vpack.c.bf16 %v169, %v169
    %v172 = vld [vmem:[%s3] sm:$0xff]
    %v173 = vld [vmem:[%s3 + $0x8] sm:$0xff]
    %v174 = vld [vmem:[%s3 + $0x10] sm:$0xff]
    %v175 = vld [vmem:[%s3 + $0x18] sm:$0xff]
    %v176 = vld [vmem:[%s3 + $0x20] sm:$0xff]
    %v177 = vld [vmem:[%s3 + $0x28] sm:$0xff]
    %v178 = vld [vmem:[%s3 + $0x30] sm:$0xff]
    %v179 = vld [vmem:[%s3 + $0x38] sm:$0xff]
    %v180 = vld [vmem:[%s3 + $0x40] sm:$0xff]
    %v181 = vld [vmem:[%s3 + $0x48] sm:$0xff]
    %v182 = vld [vmem:[%s3 + $0x50] sm:$0xff]
    %v183 = vld [vmem:[%s3 + $0x58] sm:$0xff]
    %v184 = vld [vmem:[%s3 + $0x60] sm:$0xff]
    %v185 = vld [vmem:[%s3 + $0x68] sm:$0xff]
    %v186 = vld [vmem:[%s3 + $0x70] sm:$0xff]
    %v187 = vld [vmem:[%s3 + $0x78] sm:$0xff]
    %v188 = vld [vmem:[%s3 + $0x80] sm:$0xff]
    %v189 = vld [vmem:[%s3 + $0x88] sm:$0xff]
    %v190 = vld [vmem:[%s3 + $0x90] sm:$0xff]
    %v191 = vld [vmem:[%s3 + $0x98] sm:$0xff]
    %v192 = vld [vmem:[%s3 + $0xa0] sm:$0xff]
    %v193 = vld [vmem:[%s3 + $0xa8] sm:$0xff]
    %v194 = vld [vmem:[%s3 + $0xb0] sm:$0xff]
    %v195 = vld [vmem:[%s3 + $0xb8] sm:$0xff]
    %v196 = vld [vmem:[%s3 + $0xc0] sm:$0xff]
    %v197 = vld [vmem:[%s3 + $0xc8] sm:$0xff]
    %v198 = vld [vmem:[%s3 + $0xd0] sm:$0xff]
    %v199 = vld [vmem:[%s3 + $0xd8] sm:$0xff]
    %v200 = vld [vmem:[%s3 + $0xe0] sm:$0xff]
    %v201 = vld [vmem:[%s3 + $0xe8] sm:$0xff]
    %v202 = vld [vmem:[%s3 + $0xf0] sm:$0xff]
    %v203 = vld [vmem:[%s3 + $0xf8] sm:$0xff]
    %v204 = vld [vmem:[%s3 + $0x100] sm:$0xff]
    %v205 = vld [vmem:[%s3 + $0x108] sm:$0xff]
    %v206 = vld [vmem:[%s3 + $0x110] sm:$0xff]
    %v207 = vld [vmem:[%s3 + $0x118] sm:$0xff]
    %v208 = vld [vmem:[%s3 + $0x120] sm:$0xff]
    %v209 = vld [vmem:[%s3 + $0x128] sm:$0xff]
    %v210 = vld [vmem:[%s3 + $0x130] sm:$0xff]
    %v211 = vld [vmem:[%s3 + $0x138] sm:$0xff]
    %v212 = vld [vmem:[%s3 + $0x140] sm:$0xff]
    %v213 = vld [vmem:[%s3 + $0x148] sm:$0xff]
    %v214 = vld [vmem:[%s3 + $0x150] sm:$0xff]
    %v215 = vld [vmem:[%s3 + $0x158] sm:$0xff]
    %v216 = vld [vmem:[%s3 + $0x160] sm:$0xff]
    %v217 = vld [vmem:[%s3 + $0x168] sm:$0xff]
    %v218 = vld [vmem:[%s3 + $0x170] sm:$0xff]
    %v219 = vld [vmem:[%s3 + $0x178] sm:$0xff]
    %v220 = vld [vmem:[%s3 + $0x180] sm:$0xff]
    %v221 = vld [vmem:[%s3 + $0x188] sm:$0xff]
    %v222 = vld [vmem:[%s3 + $0x190] sm:$0xff]
    %v223 = vld [vmem:[%s3 + $0x198] sm:$0xff]
    %v224 = vld [vmem:[%s3 + $0x1a0] sm:$0xff]
    %v225 = vld [vmem:[%s3 + $0x1a8] sm:$0xff]
    %v226 = vld [vmem:[%s3 + $0x1b0] sm:$0xff]
    %v227 = vld [vmem:[%s3 + $0x1b8] sm:$0xff]
    %v228 = vld [vmem:[%s3 + $0x1c0] sm:$0xff]
    %v229 = vld [vmem:[%s3 + $0x1c8] sm:$0xff]
    %v230 = vld [vmem:[%s3 + $0x1d0] sm:$0xff]
    %v231 = vld [vmem:[%s3 + $0x1d8] sm:$0xff]
    %v232 = vld [vmem:[%s3 + $0x1e0] sm:$0xff]
    %v233 = vld [vmem:[%s3 + $0x1e8] sm:$0xff]
    %v234 = vld [vmem:[%s3 + $0x1f0] sm:$0xff]
    %v235 = vld [vmem:[%s3 + $0x1f8] sm:$0xff]
    %v236 = vld [vmem:[%s4] sm:$0xf]
    %v238 = vperm.slane %v236, 0
    %v239 = vperm.slane %v236, 1
    %v240 = vperm.slane %v236, 2
    %v241 = vperm.slane %v236, 3
    %v310 = vunpack.c.l.b16 %v172
    %v311 = vunpack.c.h.b16 %v172
    %v312 = vunpack.c.l.b16 %v173
    %v313 = vunpack.c.h.b16 %v173
    %v314 = vunpack.c.l.b16 %v174
    %v315 = vunpack.c.h.b16 %v174
    %v316 = vunpack.c.l.b16 %v175
    %v317 = vunpack.c.h.b16 %v175
    %v318 = vunpack.c.l.b16 %v176
    %v319 = vunpack.c.h.b16 %v176
    %v320 = vunpack.c.l.b16 %v177
    %v321 = vunpack.c.h.b16 %v177
    %v322 = vunpack.c.l.b16 %v178
    %v323 = vunpack.c.h.b16 %v178
    %v324 = vunpack.c.l.b16 %v179
    %v325 = vunpack.c.h.b16 %v179
    %v326 = vunpack.c.l.b16 %v180
    %v327 = vunpack.c.h.b16 %v180
    %v328 = vunpack.c.l.b16 %v181
    %v329 = vunpack.c.h.b16 %v181
    %v330 = vunpack.c.l.b16 %v182
    %v331 = vunpack.c.h.b16 %v182
    %v332 = vunpack.c.l.b16 %v183
    %v333 = vunpack.c.h.b16 %v183
    %v334 = vunpack.c.l.b16 %v184
    %v335 = vunpack.c.h.b16 %v184
    %v336 = vunpack.c.l.b16 %v185
    %v337 = vunpack.c.h.b16 %v185
    %v338 = vunpack.c.l.b16 %v186
    %v339 = vunpack.c.h.b16 %v186
    %v340 = vunpack.c.l.b16 %v187
    %v341 = vunpack.c.h.b16 %v187
    %v342 = vunpack.c.l.b16 %v188
    %v343 = vunpack.c.h.b16 %v188
    %v344 = vunpack.c.l.b16 %v189
    %v345 = vunpack.c.h.b16 %v189
    %v346 = vunpack.c.l.b16 %v190
    %v347 = vunpack.c.h.b16 %v190
    %v348 = vunpack.c.l.b16 %v191
    %v349 = vunpack.c.h.b16 %v191
    %v350 = vunpack.c.l.b16 %v192
    %v351 = vunpack.c.h.b16 %v192
    %v352 = vunpack.c.l.b16 %v193
    %v353 = vunpack.c.h.b16 %v193
    %v354 = vunpack.c.l.b16 %v194
    %v355 = vunpack.c.h.b16 %v194
    %v356 = vunpack.c.l.b16 %v195
    %v357 = vunpack.c.h.b16 %v195
    %v358 = vunpack.c.l.b16 %v196
    %v359 = vunpack.c.h.b16 %v196
    %v360 = vunpack.c.l.b16 %v197
    %v361 = vunpack.c.h.b16 %v197
    %v362 = vunpack.c.l.b16 %v198
    %v363 = vunpack.c.h.b16 %v198
    %v364 = vunpack.c.l.b16 %v199
    %v365 = vunpack.c.h.b16 %v199
    %v366 = vunpack.c.l.b16 %v200
    %v367 = vunpack.c.h.b16 %v200
    %v368 = vunpack.c.l.b16 %v201
    %v369 = vunpack.c.h.b16 %v201
    %v370 = vunpack.c.l.b16 %v202
    %v371 = vunpack.c.h.b16 %v202
    %v372 = vunpack.c.l.b16 %v203
    %v373 = vunpack.c.h.b16 %v203
    %v374 = vunpack.c.l.b16 %v204
    %v375 = vunpack.c.h.b16 %v204
    %v376 = vunpack.c.l.b16 %v205
    %v377 = vunpack.c.h.b16 %v205
    %v378 = vunpack.c.l.b16 %v206
    %v379 = vunpack.c.h.b16 %v206
    %v380 = vunpack.c.l.b16 %v207
    %v381 = vunpack.c.h.b16 %v207
    %v382 = vunpack.c.l.b16 %v208
    %v383 = vunpack.c.h.b16 %v208
    %v384 = vunpack.c.l.b16 %v209
    %v385 = vunpack.c.h.b16 %v209
    %v386 = vunpack.c.l.b16 %v210
    %v387 = vunpack.c.h.b16 %v210
    %v388 = vunpack.c.l.b16 %v211
    %v389 = vunpack.c.h.b16 %v211
    %v390 = vunpack.c.l.b16 %v212
    %v391 = vunpack.c.h.b16 %v212
    %v392 = vunpack.c.l.b16 %v213
    %v393 = vunpack.c.h.b16 %v213
    %v394 = vunpack.c.l.b16 %v214
    %v395 = vunpack.c.h.b16 %v214
    %v396 = vunpack.c.l.b16 %v215
    %v397 = vunpack.c.h.b16 %v215
    %v398 = vunpack.c.l.b16 %v216
    %v399 = vunpack.c.h.b16 %v216
    %v400 = vunpack.c.l.b16 %v217
    %v401 = vunpack.c.h.b16 %v217
    %v402 = vunpack.c.l.b16 %v218
    %v403 = vunpack.c.h.b16 %v218
    %v404 = vunpack.c.l.b16 %v219
    %v405 = vunpack.c.h.b16 %v219
    %v406 = vunpack.c.l.b16 %v220
    %v407 = vunpack.c.h.b16 %v220
    %v408 = vunpack.c.l.b16 %v221
    %v409 = vunpack.c.h.b16 %v221
    %v410 = vunpack.c.l.b16 %v222
    %v411 = vunpack.c.h.b16 %v222
    %v412 = vunpack.c.l.b16 %v223
    %v413 = vunpack.c.h.b16 %v223
    %v414 = vunpack.c.l.b16 %v224
    %v415 = vunpack.c.h.b16 %v224
    %v416 = vunpack.c.l.b16 %v225
    %v417 = vunpack.c.h.b16 %v225
    %v418 = vunpack.c.l.b16 %v226
    %v419 = vunpack.c.h.b16 %v226
    %v420 = vunpack.c.l.b16 %v227
    %v421 = vunpack.c.h.b16 %v227
    %v422 = vunpack.c.l.b16 %v228
    %v423 = vunpack.c.h.b16 %v228
    %v424 = vunpack.c.l.b16 %v229
    %v425 = vunpack.c.h.b16 %v229
    %v426 = vunpack.c.l.b16 %v230
    %v427 = vunpack.c.h.b16 %v230
    %v428 = vunpack.c.l.b16 %v231
    %v429 = vunpack.c.h.b16 %v231
    %v430 = vunpack.c.l.b16 %v232
    %v431 = vunpack.c.h.b16 %v232
    %v432 = vunpack.c.l.b16 %v233
    %v433 = vunpack.c.h.b16 %v233
    %v434 = vunpack.c.l.b16 %v234
    %v435 = vunpack.c.h.b16 %v234
    %v436 = vunpack.c.l.b16 %v235
    %v437 = vunpack.c.h.b16 %v235
    %v438 = vpack.c.b16 %v314, %v310
    %v439 = vpack.c.b16 %v315, %v311
    %v440 = vpack.c.b16 %v316, %v312
    %v441 = vpack.c.b16 %v317, %v313
    %v442 = vpack.c.b16 %v322, %v318
    %v443 = vpack.c.b16 %v323, %v319
    %v444 = vpack.c.b16 %v324, %v320
    %v445 = vpack.c.b16 %v325, %v321
    %v446 = vpack.c.b16 %v330, %v326
    %v447 = vpack.c.b16 %v331, %v327
    %v448 = vpack.c.b16 %v332, %v328
    %v449 = vpack.c.b16 %v333, %v329
    %v450 = vpack.c.b16 %v338, %v334
    %v451 = vpack.c.b16 %v339, %v335
    %v452 = vpack.c.b16 %v340, %v336
    %v453 = vpack.c.b16 %v341, %v337
    %v454 = vpack.c.b16 %v346, %v342
    %v455 = vpack.c.b16 %v347, %v343
    %v456 = vpack.c.b16 %v348, %v344
    %v457 = vpack.c.b16 %v349, %v345
    %v458 = vpack.c.b16 %v354, %v350
    %v459 = vpack.c.b16 %v355, %v351
    %v460 = vpack.c.b16 %v356, %v352
    %v461 = vpack.c.b16 %v357, %v353
    %v462 = vpack.c.b16 %v362, %v358
    %v463 = vpack.c.b16 %v363, %v359
    %v464 = vpack.c.b16 %v364, %v360
    %v465 = vpack.c.b16 %v365, %v361
    %v466 = vpack.c.b16 %v370, %v366
    %v467 = vpack.c.b16 %v371, %v367
    %v468 = vpack.c.b16 %v372, %v368
    %v469 = vpack.c.b16 %v373, %v369
    %v470 = vpack.c.b16 %v378, %v374
    %v471 = vpack.c.b16 %v379, %v375
    %v472 = vpack.c.b16 %v380, %v376
    %v473 = vpack.c.b16 %v381, %v377
    %v474 = vpack.c.b16 %v386, %v382
    %v475 = vpack.c.b16 %v387, %v383
    %v476 = vpack.c.b16 %v388, %v384
    %v477 = vpack.c.b16 %v389, %v385
    %v478 = vpack.c.b16 %v394, %v390
    %v479 = vpack.c.b16 %v395, %v391
    %v480 = vpack.c.b16 %v396, %v392
    %v481 = vpack.c.b16 %v397, %v393
    %v482 = vpack.c.b16 %v402, %v398
    %v483 = vpack.c.b16 %v403, %v399
    %v484 = vpack.c.b16 %v404, %v400
    %v485 = vpack.c.b16 %v405, %v401
    %v486 = vpack.c.b16 %v410, %v406
    %v487 = vpack.c.b16 %v411, %v407
    %v488 = vpack.c.b16 %v412, %v408
    %v489 = vpack.c.b16 %v413, %v409
    %v490 = vpack.c.b16 %v418, %v414
    %v491 = vpack.c.b16 %v419, %v415
    %v492 = vpack.c.b16 %v420, %v416
    %v493 = vpack.c.b16 %v421, %v417
    %v494 = vpack.c.b16 %v426, %v422
    %v495 = vpack.c.b16 %v427, %v423
    %v496 = vpack.c.b16 %v428, %v424
    %v497 = vpack.c.b16 %v429, %v425
    %v498 = vpack.c.b16 %v434, %v430
    %v499 = vpack.c.b16 %v435, %v431
    %v500 = vpack.c.b16 %v436, %v432
    %v501 = vpack.c.b16 %v437, %v433
    %566 = vmatpush.bf16.msra.mxu0 %v466
    %567 = vmatpush.bf16.msra.mxu0 %v462
    %568 = vmatpush.bf16.msra.mxu0 %v458
    %569 = vmatpush.bf16.msra.mxu0 %v454
    %570 = vmatpush.bf16.msra.mxu0 %v450
    %571 = vmatpush.bf16.msra.mxu0 %v446
    %572 = vmatpush.bf16.msra.mxu0 %v442
    %573 = vmatpush.bf16.msra.mxu0 %v438
    %574 = vmatmul.bf16.gmra.mxu0 %v170
    %v575 = vpop.f32.mrf.mxu0
    %v576 = vadd.f32 %v238, %v575
    %v577 = vpop.f32.mrf.mxu0
    %578 = vdwg.mxu0
    %579 = vmatpush.bf16.msra.mxu0 %v498
    %580 = vmatpush.bf16.msra.mxu0 %v494
    %581 = vmatpush.bf16.msra.mxu0 %v490
    %582 = vmatpush.bf16.msra.mxu0 %v486
    %583 = vmatpush.bf16.msra.mxu0 %v482
    %584 = vmatpush.bf16.msra.mxu0 %v478
    %585 = vmatpush.bf16.msra.mxu0 %v474
    %586 = vmatpush.bf16.msra.mxu0 %v470
    %587 = vmatmul.bf16.gmra.mxu0 %v171
    %v588 = vpop.f32.mrf.mxu0
    %v589 = vadd.f32 %v576, %v588
    %v590 = vpop.f32.mrf.mxu0
    %591 = vdwg.mxu0
    %592 = vmatpush.bf16.msra.mxu0 %v467
    %593 = vmatpush.bf16.msra.mxu0 %v463
    %594 = vmatpush.bf16.msra.mxu0 %v459
    %595 = vmatpush.bf16.msra.mxu0 %v455
    %596 = vmatpush.bf16.msra.mxu0 %v451
    %597 = vmatpush.bf16.msra.mxu0 %v447
    %598 = vmatpush.bf16.msra.mxu0 %v443
    %599 = vmatpush.bf16.msra.mxu0 %v439
    %600 = vmatmul.bf16.gmra.mxu0 %v170
    %v601 = vpop.f32.mrf.mxu0
    %v602 = vadd.f32 %v239, %v601
    %v603 = vpop.f32.mrf.mxu0
    %604 = vdwg.mxu0
    %605 = vmatpush.bf16.msra.mxu0 %v499
    %606 = vmatpush.bf16.msra.mxu0 %v495
    %607 = vmatpush.bf16.msra.mxu0 %v491
    %608 = vmatpush.bf16.msra.mxu0 %v487
    %609 = vmatpush.bf16.msra.mxu0 %v483
    %610 = vmatpush.bf16.msra.mxu0 %v479
    %611 = vmatpush.bf16.msra.mxu0 %v475
    %612 = vmatpush.bf16.msra.mxu0 %v471
    %613 = vmatmul.bf16.gmra.mxu0 %v171
    %v614 = vpop.f32.mrf.mxu0
    %v615 = vadd.f32 %v602, %v614
    %v616 = vpop.f32.mrf.mxu0
    %617 = vdwg.mxu0
    %618 = vmatpush.bf16.msra.mxu0 %v468
    %619 = vmatpush.bf16.msra.mxu0 %v464
    %620 = vmatpush.bf16.msra.mxu0 %v460
    %621 = vmatpush.bf16.msra.mxu0 %v456
    %622 = vmatpush.bf16.msra.mxu0 %v452
    %623 = vmatpush.bf16.msra.mxu0 %v448
    %624 = vmatpush.bf16.msra.mxu0 %v444
    %625 = vmatpush.bf16.msra.mxu0 %v440
    %626 = vmatmul.bf16.gmra.mxu0 %v170
    %v627 = vpop.f32.mrf.mxu0
    %v628 = vadd.f32 %v240, %v627
    %v629 = vpop.f32.mrf.mxu0
    %630 = vdwg.mxu0
    %631 = vmatpush.bf16.msra.mxu0 %v500
    %632 = vmatpush.bf16.msra.mxu0 %v496
    %633 = vmatpush.bf16.msra.mxu0 %v492
    %634 = vmatpush.bf16.msra.mxu0 %v488
    %635 = vmatpush.bf16.msra.mxu0 %v484
    %636 = vmatpush.bf16.msra.mxu0 %v480
    %637 = vmatpush.bf16.msra.mxu0 %v476
    %638 = vmatpush.bf16.msra.mxu0 %v472
    %639 = vmatmul.bf16.gmra.mxu0 %v171
    %v640 = vpop.f32.mrf.mxu0
    %v641 = vadd.f32 %v628, %v640
    %v642 = vpop.f32.mrf.mxu0
    %643 = vdwg.mxu0
    %644 = vmatpush.bf16.msra.mxu0 %v469
    %645 = vmatpush.bf16.msra.mxu0 %v465
    %646 = vmatpush.bf16.msra.mxu0 %v461
    %647 = vmatpush.bf16.msra.mxu0 %v457
    %648 = vmatpush.bf16.msra.mxu0 %v453
    %649 = vmatpush.bf16.msra.mxu0 %v449
    %650 = vmatpush.bf16.msra.mxu0 %v445
    %651 = vmatpush.bf16.msra.mxu0 %v441
    %652 = vmatmul.bf16.gmra.mxu0 %v170
    %v653 = vpop.f32.mrf.mxu0
    %v654 = vadd.f32 %v241, %v653
    %v655 = vpop.f32.mrf.mxu0
    %656 = vdwg.mxu0
    %657 = vmatpush.bf16.msra.mxu0 %v501
    %658 = vmatpush.bf16.msra.mxu0 %v497
    %659 = vmatpush.bf16.msra.mxu0 %v493
    %660 = vmatpush.bf16.msra.mxu0 %v489
    %661 = vmatpush.bf16.msra.mxu0 %v485
    %662 = vmatpush.bf16.msra.mxu0 %v481
    %663 = vmatpush.bf16.msra.mxu0 %v477
    %664 = vmatpush.bf16.msra.mxu0 %v473
    %665 = vmatmul.bf16.gmra.mxu0 %v171
    %v666 = vpop.f32.mrf.mxu0
    %v667 = vadd.f32 %v654, %v666
    %v668 = vpop.f32.mrf.mxu0
    %669 = vdwg.mxu0
    %v670 = vmax.f32 %v589, 0.0
    %v671 = vmax.f32 %v615, 0.0
    %v672 = vmax.f32 %v641, 0.0
    %v673 = vmax.f32 %v667, 0.0
    %v674 = vpack.c.bf16 %v670, %v670
    %v675 = vpack.c.bf16 %v671, %v671
    %v676 = vpack.c.bf16 %v672, %v672
    %v677 = vpack.c.bf16 %v673, %v673
    %v678 = vld [vmem:[%s5] sm:$0xff]
    %v679 = vld [vmem:[%s5 + $0x8] sm:$0xff]
    %v680 = vld [vmem:[%s5 + $0x10] sm:$0xff]
    %v681 = vld [vmem:[%s5 + $0x18] sm:$0xff]
    %v682 = vld [vmem:[%s5 + $0x20] sm:$0xff]
    %v683 = vld [vmem:[%s5 + $0x28] sm:$0xff]
    %v684 = vld [vmem:[%s5 + $0x30] sm:$0xff]
    %v685 = vld [vmem:[%s5 + $0x38] sm:$0xff]
    %v686 = vld [vmem:[%s5 + $0x40] sm:$0xff]
    %v687 = vld [vmem:[%s5 + $0x48] sm:$0xff]
    %v688 = vld [vmem:[%s5 + $0x50] sm:$0xff]
    %v689 = vld [vmem:[%s5 + $0x58] sm:$0xff]
    %v690 = vld [vmem:[%s5 + $0x60] sm:$0xff]
    %v691 = vld [vmem:[%s5 + $0x68] sm:$0xff]
    %v692 = vld [vmem:[%s5 + $0x70] sm:$0xff]
    %v693 = vld [vmem:[%s5 + $0x78] sm:$0xff]
    %v694 = vld [vmem:[%s5 + $0x80] sm:$0xff]
    %v695 = vld [vmem:[%s5 + $0x88] sm:$0xff]
    %v696 = vld [vmem:[%s5 + $0x90] sm:$0xff]
    %v697 = vld [vmem:[%s5 + $0x98] sm:$0xff]
    %v698 = vld [vmem:[%s5 + $0xa0] sm:$0xff]
    %v699 = vld [vmem:[%s5 + $0xa8] sm:$0xff]
    %v700 = vld [vmem:[%s5 + $0xb0] sm:$0xff]
    %v701 = vld [vmem:[%s5 + $0xb8] sm:$0xff]
    %v702 = vld [vmem:[%s5 + $0xc0] sm:$0xff]
    %v703 = vld [vmem:[%s5 + $0xc8] sm:$0xff]
    %v704 = vld [vmem:[%s5 + $0xd0] sm:$0xff]
    %v705 = vld [vmem:[%s5 + $0xd8] sm:$0xff]
    %v706 = vld [vmem:[%s5 + $0xe0] sm:$0xff]
    %v707 = vld [vmem:[%s5 + $0xe8] sm:$0xff]
    %v708 = vld [vmem:[%s5 + $0xf0] sm:$0xff]
    %v709 = vld [vmem:[%s5 + $0xf8] sm:$0xff]
    %v710 = vld [vmem:[%s5 + $0x100] sm:$0xff]
    %v711 = vld [vmem:[%s5 + $0x108] sm:$0xff]
    %v712 = vld [vmem:[%s5 + $0x110] sm:$0xff]
    %v713 = vld [vmem:[%s5 + $0x118] sm:$0xff]
    %v714 = vld [vmem:[%s5 + $0x120] sm:$0xff]
    %v715 = vld [vmem:[%s5 + $0x128] sm:$0xff]
    %v716 = vld [vmem:[%s5 + $0x130] sm:$0xff]
    %v717 = vld [vmem:[%s5 + $0x138] sm:$0xff]
    %v718 = vld [vmem:[%s5 + $0x140] sm:$0xff]
    %v719 = vld [vmem:[%s5 + $0x148] sm:$0xff]
    %v720 = vld [vmem:[%s5 + $0x150] sm:$0xff]
    %v721 = vld [vmem:[%s5 + $0x158] sm:$0xff]
    %v722 = vld [vmem:[%s5 + $0x160] sm:$0xff]
    %v723 = vld [vmem:[%s5 + $0x168] sm:$0xff]
    %v724 = vld [vmem:[%s5 + $0x170] sm:$0xff]
    %v725 = vld [vmem:[%s5 + $0x178] sm:$0xff]
    %v726 = vld [vmem:[%s5 + $0x180] sm:$0xff]
    %v727 = vld [vmem:[%s5 + $0x188] sm:$0xff]
    %v728 = vld [vmem:[%s5 + $0x190] sm:$0xff]
    %v729 = vld [vmem:[%s5 + $0x198] sm:$0xff]
    %v730 = vld [vmem:[%s5 + $0x1a0] sm:$0xff]
    %v731 = vld [vmem:[%s5 + $0x1a8] sm:$0xff]
    %v732 = vld [vmem:[%s5 + $0x1b0] sm:$0xff]
    %v733 = vld [vmem:[%s5 + $0x1b8] sm:$0xff]
    %v734 = vld [vmem:[%s5 + $0x1c0] sm:$0xff]
    %v735 = vld [vmem:[%s5 + $0x1c8] sm:$0xff]
    %v736 = vld [vmem:[%s5 + $0x1d0] sm:$0xff]
    %v737 = vld [vmem:[%s5 + $0x1d8] sm:$0xff]
    %v738 = vld [vmem:[%s5 + $0x1e0] sm:$0xff]
    %v739 = vld [vmem:[%s5 + $0x1e8] sm:$0xff]
    %v740 = vld [vmem:[%s5 + $0x1f0] sm:$0xff]
    %v741 = vld [vmem:[%s5 + $0x1f8] sm:$0xff]
    %v742 = vld [vmem:[%s5 + $0x200] sm:$0xff]
    %v743 = vld [vmem:[%s5 + $0x208] sm:$0xff]
    %v744 = vld [vmem:[%s5 + $0x210] sm:$0xff]
    %v745 = vld [vmem:[%s5 + $0x218] sm:$0xff]
    %v746 = vld [vmem:[%s5 + $0x220] sm:$0xff]
    %v747 = vld [vmem:[%s5 + $0x228] sm:$0xff]
    %v748 = vld [vmem:[%s5 + $0x230] sm:$0xff]
    %v749 = vld [vmem:[%s5 + $0x238] sm:$0xff]
    %v750 = vld [vmem:[%s5 + $0x240] sm:$0xff]
    %v751 = vld [vmem:[%s5 + $0x248] sm:$0xff]
    %v752 = vld [vmem:[%s5 + $0x250] sm:$0xff]
    %v753 = vld [vmem:[%s5 + $0x258] sm:$0xff]
    %v754 = vld [vmem:[%s5 + $0x260] sm:$0xff]
    %v755 = vld [vmem:[%s5 + $0x268] sm:$0xff]
    %v756 = vld [vmem:[%s5 + $0x270] sm:$0xff]
    %v757 = vld [vmem:[%s5 + $0x278] sm:$0xff]
    %v758 = vld [vmem:[%s5 + $0x280] sm:$0xff]
    %v759 = vld [vmem:[%s5 + $0x288] sm:$0xff]
    %v760 = vld [vmem:[%s5 + $0x290] sm:$0xff]
    %v761 = vld [vmem:[%s5 + $0x298] sm:$0xff]
    %v762 = vld [vmem:[%s5 + $0x2a0] sm:$0xff]
    %v763 = vld [vmem:[%s5 + $0x2a8] sm:$0xff]
    %v764 = vld [vmem:[%s5 + $0x2b0] sm:$0xff]
    %v765 = vld [vmem:[%s5 + $0x2b8] sm:$0xff]
    %v766 = vld [vmem:[%s5 + $0x2c0] sm:$0xff]
    %v767 = vld [vmem:[%s5 + $0x2c8] sm:$0xff]
    %v768 = vld [vmem:[%s5 + $0x2d0] sm:$0xff]
    %v769 = vld [vmem:[%s5 + $0x2d8] sm:$0xff]
    %v770 = vld [vmem:[%s5 + $0x2e0] sm:$0xff]
    %v771 = vld [vmem:[%s5 + $0x2e8] sm:$0xff]
    %v772 = vld [vmem:[%s5 + $0x2f0] sm:$0xff]
    %v773 = vld [vmem:[%s5 + $0x2f8] sm:$0xff]
    %v774 = vld [vmem:[%s5 + $0x300] sm:$0xff]
    %v775 = vld [vmem:[%s5 + $0x308] sm:$0xff]
    %v776 = vld [vmem:[%s5 + $0x310] sm:$0xff]
    %v777 = vld [vmem:[%s5 + $0x318] sm:$0xff]
    %v778 = vld [vmem:[%s5 + $0x320] sm:$0xff]
    %v779 = vld [vmem:[%s5 + $0x328] sm:$0xff]
    %v780 = vld [vmem:[%s5 + $0x330] sm:$0xff]
    %v781 = vld [vmem:[%s5 + $0x338] sm:$0xff]
    %v782 = vld [vmem:[%s5 + $0x340] sm:$0xff]
    %v783 = vld [vmem:[%s5 + $0x348] sm:$0xff]
    %v784 = vld [vmem:[%s5 + $0x350] sm:$0xff]
    %v785 = vld [vmem:[%s5 + $0x358] sm:$0xff]
    %v786 = vld [vmem:[%s5 + $0x360] sm:$0xff]
    %v787 = vld [vmem:[%s5 + $0x368] sm:$0xff]
    %v788 = vld [vmem:[%s5 + $0x370] sm:$0xff]
    %v789 = vld [vmem:[%s5 + $0x378] sm:$0xff]
    %v790 = vld [vmem:[%s5 + $0x380] sm:$0xff]
    %v791 = vld [vmem:[%s5 + $0x388] sm:$0xff]
    %v792 = vld [vmem:[%s5 + $0x390] sm:$0xff]
    %v793 = vld [vmem:[%s5 + $0x398] sm:$0xff]
    %v794 = vld [vmem:[%s5 + $0x3a0] sm:$0xff]
    %v795 = vld [vmem:[%s5 + $0x3a8] sm:$0xff]
    %v796 = vld [vmem:[%s5 + $0x3b0] sm:$0xff]
    %v797 = vld [vmem:[%s5 + $0x3b8] sm:$0xff]
    %v798 = vld [vmem:[%s5 + $0x3c0] sm:$0xff]
    %v799 = vld [vmem:[%s5 + $0x3c8] sm:$0xff]
    %v800 = vld [vmem:[%s5 + $0x3d0] sm:$0xff]
    %v801 = vld [vmem:[%s5 + $0x3d8] sm:$0xff]
    %v802 = vld [vmem:[%s5 + $0x3e0] sm:$0xff]
    %v803 = vld [vmem:[%s5 + $0x3e8] sm:$0xff]
    %v804 = vld [vmem:[%s5 + $0x3f0] sm:$0xff]
    %v805 = vld [vmem:[%s5 + $0x3f8] sm:$0xff]
    %v806 = vld [vmem:[%s6] sm:$0xf]
    %v808 = vperm.slane %v806, 0
    %v809 = vperm.slane %v806, 1
    %v810 = vperm.slane %v806, 2
    %v811 = vperm.slane %v806, 3
    %v944 = vunpack.c.l.b16 %v678
    %v945 = vunpack.c.h.b16 %v678
    %v946 = vunpack.c.l.b16 %v679
    %v947 = vunpack.c.h.b16 %v679
    %v948 = vunpack.c.l.b16 %v680
    %v949 = vunpack.c.h.b16 %v680
    %v950 = vunpack.c.l.b16 %v681
    %v951 = vunpack.c.h.b16 %v681
    %v952 = vunpack.c.l.b16 %v682
    %v953 = vunpack.c.h.b16 %v682
    %v954 = vunpack.c.l.b16 %v683
    %v955 = vunpack.c.h.b16 %v683
    %v956 = vunpack.c.l.b16 %v684
    %v957 = vunpack.c.h.b16 %v684
    %v958 = vunpack.c.l.b16 %v685
    %v959 = vunpack.c.h.b16 %v685
    %v960 = vunpack.c.l.b16 %v686
    %v961 = vunpack.c.h.b16 %v686
    %v962 = vunpack.c.l.b16 %v687
    %v963 = vunpack.c.h.b16 %v687
    %v964 = vunpack.c.l.b16 %v688
    %v965 = vunpack.c.h.b16 %v688
    %v966 = vunpack.c.l.b16 %v689
    %v967 = vunpack.c.h.b16 %v689
    %v968 = vunpack.c.l.b16 %v690
    %v969 = vunpack.c.h.b16 %v690
    %v970 = vunpack.c.l.b16 %v691
    %v971 = vunpack.c.h.b16 %v691
    %v972 = vunpack.c.l.b16 %v692
    %v973 = vunpack.c.h.b16 %v692
    %v974 = vunpack.c.l.b16 %v693
    %v975 = vunpack.c.h.b16 %v693
    %v976 = vunpack.c.l.b16 %v694
    %v977 = vunpack.c.h.b16 %v694
    %v978 = vunpack.c.l.b16 %v695
    %v979 = vunpack.c.h.b16 %v695
    %v980 = vunpack.c.l.b16 %v696
    %v981 = vunpack.c.h.b16 %v696
    %v982 = vunpack.c.l.b16 %v697
    %v983 = vunpack.c.h.b16 %v697
    %v984 = vunpack.c.l.b16 %v698
    %v985 = vunpack.c.h.b16 %v698
    %v986 = vunpack.c.l.b16 %v699
    %v987 = vunpack.c.h.b16 %v699
    %v988 = vunpack.c.l.b16 %v700
    %v989 = vunpack.c.h.b16 %v700
    %v990 = vunpack.c.l.b16 %v701
    %v991 = vunpack.c.h.b16 %v701
    %v992 = vunpack.c.l.b16 %v702
    %v993 = vunpack.c.h.b16 %v702
    %v994 = vunpack.c.l.b16 %v703
    %v995 = vunpack.c.h.b16 %v703
    %v996 = vunpack.c.l.b16 %v704
    %v997 = vunpack.c.h.b16 %v704
    %v998 = vunpack.c.l.b16 %v705
    %v999 = vunpack.c.h.b16 %v705
    %v1000 = vunpack.c.l.b16 %v706
    %v1001 = vunpack.c.h.b16 %v706
    %v1002 = vunpack.c.l.b16 %v707
    %v1003 = vunpack.c.h.b16 %v707
    %v1004 = vunpack.c.l.b16 %v708
    %v1005 = vunpack.c.h.b16 %v708
    %v1006 = vunpack.c.l.b16 %v709
    %v1007 = vunpack.c.h.b16 %v709
    %v1008 = vunpack.c.l.b16 %v710
    %v1009 = vunpack.c.h.b16 %v710
    %v1010 = vunpack.c.l.b16 %v711
    %v1011 = vunpack.c.h.b16 %v711
    %v1012 = vunpack.c.l.b16 %v712
    %v1013 = vunpack.c.h.b16 %v712
    %v1014 = vunpack.c.l.b16 %v713
    %v1015 = vunpack.c.h.b16 %v713
    %v1016 = vunpack.c.l.b16 %v714
    %v1017 = vunpack.c.h.b16 %v714
    %v1018 = vunpack.c.l.b16 %v715
    %v1019 = vunpack.c.h.b16 %v715
    %v1020 = vunpack.c.l.b16 %v716
    %v1021 = vunpack.c.h.b16 %v716
    %v1022 = vunpack.c.l.b16 %v717
    %v1023 = vunpack.c.h.b16 %v717
    %v1024 = vunpack.c.l.b16 %v718
    %v1025 = vunpack.c.h.b16 %v718
    %v1026 = vunpack.c.l.b16 %v719
    %v1027 = vunpack.c.h.b16 %v719
    %v1028 = vunpack.c.l.b16 %v720
    %v1029 = vunpack.c.h.b16 %v720
    %v1030 = vunpack.c.l.b16 %v721
    %v1031 = vunpack.c.h.b16 %v721
    %v1032 = vunpack.c.l.b16 %v722
    %v1033 = vunpack.c.h.b16 %v722
    %v1034 = vunpack.c.l.b16 %v723
    %v1035 = vunpack.c.h.b16 %v723
    %v1036 = vunpack.c.l.b16 %v724
    %v1037 = vunpack.c.h.b16 %v724
    %v1038 = vunpack.c.l.b16 %v725
    %v1039 = vunpack.c.h.b16 %v725
    %v1040 = vunpack.c.l.b16 %v726
    %v1041 = vunpack.c.h.b16 %v726
    %v1042 = vunpack.c.l.b16 %v727
    %v1043 = vunpack.c.h.b16 %v727
    %v1044 = vunpack.c.l.b16 %v728
    %v1045 = vunpack.c.h.b16 %v728
    %v1046 = vunpack.c.l.b16 %v729
    %v1047 = vunpack.c.h.b16 %v729
    %v1048 = vunpack.c.l.b16 %v730
    %v1049 = vunpack.c.h.b16 %v730
    %v1050 = vunpack.c.l.b16 %v731
    %v1051 = vunpack.c.h.b16 %v731
    %v1052 = vunpack.c.l.b16 %v732
    %v1053 = vunpack.c.h.b16 %v732
    %v1054 = vunpack.c.l.b16 %v733
    %v1055 = vunpack.c.h.b16 %v733
    %v1056 = vunpack.c.l.b16 %v734
    %v1057 = vunpack.c.h.b16 %v734
    %v1058 = vunpack.c.l.b16 %v735
    %v1059 = vunpack.c.h.b16 %v735
    %v1060 = vunpack.c.l.b16 %v736
    %v1061 = vunpack.c.h.b16 %v736
    %v1062 = vunpack.c.l.b16 %v737
    %v1063 = vunpack.c.h.b16 %v737
    %v1064 = vunpack.c.l.b16 %v738
    %v1065 = vunpack.c.h.b16 %v738
    %v1066 = vunpack.c.l.b16 %v739
    %v1067 = vunpack.c.h.b16 %v739
    %v1068 = vunpack.c.l.b16 %v740
    %v1069 = vunpack.c.h.b16 %v740
    %v1070 = vunpack.c.l.b16 %v741
    %v1071 = vunpack.c.h.b16 %v741
    %v1072 = vunpack.c.l.b16 %v742
    %v1073 = vunpack.c.h.b16 %v742
    %v1074 = vunpack.c.l.b16 %v743
    %v1075 = vunpack.c.h.b16 %v743
    %v1076 = vunpack.c.l.b16 %v744
    %v1077 = vunpack.c.h.b16 %v744
    %v1078 = vunpack.c.l.b16 %v745
    %v1079 = vunpack.c.h.b16 %v745
    %v1080 = vunpack.c.l.b16 %v746
    %v1081 = vunpack.c.h.b16 %v746
    %v1082 = vunpack.c.l.b16 %v747
    %v1083 = vunpack.c.h.b16 %v747
    %v1084 = vunpack.c.l.b16 %v748
    %v1085 = vunpack.c.h.b16 %v748
    %v1086 = vunpack.c.l.b16 %v749
    %v1087 = vunpack.c.h.b16 %v749
    %v1088 = vunpack.c.l.b16 %v750
    %v1089 = vunpack.c.h.b16 %v750
    %v1090 = vunpack.c.l.b16 %v751
    %v1091 = vunpack.c.h.b16 %v751
    %v1092 = vunpack.c.l.b16 %v752
    %v1093 = vunpack.c.h.b16 %v752
    %v1094 = vunpack.c.l.b16 %v753
    %v1095 = vunpack.c.h.b16 %v753
    %v1096 = vunpack.c.l.b16 %v754
    %v1097 = vunpack.c.h.b16 %v754
    %v1098 = vunpack.c.l.b16 %v755
    %v1099 = vunpack.c.h.b16 %v755
    %v1100 = vunpack.c.l.b16 %v756
    %v1101 = vunpack.c.h.b16 %v756
    %v1102 = vunpack.c.l.b16 %v757
    %v1103 = vunpack.c.h.b16 %v757
    %v1104 = vunpack.c.l.b16 %v758
    %v1105 = vunpack.c.h.b16 %v758
    %v1106 = vunpack.c.l.b16 %v759
    %v1107 = vunpack.c.h.b16 %v759
    %v1108 = vunpack.c.l.b16 %v760
    %v1109 = vunpack.c.h.b16 %v760
    %v1110 = vunpack.c.l.b16 %v761
    %v1111 = vunpack.c.h.b16 %v761
    %v1112 = vunpack.c.l.b16 %v762
    %v1113 = vunpack.c.h.b16 %v762
    %v1114 = vunpack.c.l.b16 %v763
    %v1115 = vunpack.c.h.b16 %v763
    %v1116 = vunpack.c.l.b16 %v764
    %v1117 = vunpack.c.h.b16 %v764
    %v1118 = vunpack.c.l.b16 %v765
    %v1119 = vunpack.c.h.b16 %v765
    %v1120 = vunpack.c.l.b16 %v766
    %v1121 = vunpack.c.h.b16 %v766
    %v1122 = vunpack.c.l.b16 %v767
    %v1123 = vunpack.c.h.b16 %v767
    %v1124 = vunpack.c.l.b16 %v768
    %v1125 = vunpack.c.h.b16 %v768
    %v1126 = vunpack.c.l.b16 %v769
    %v1127 = vunpack.c.h.b16 %v769
    %v1128 = vunpack.c.l.b16 %v770
    %v1129 = vunpack.c.h.b16 %v770
    %v1130 = vunpack.c.l.b16 %v771
    %v1131 = vunpack.c.h.b16 %v771
    %v1132 = vunpack.c.l.b16 %v772
    %v1133 = vunpack.c.h.b16 %v772
    %v1134 = vunpack.c.l.b16 %v773
    %v1135 = vunpack.c.h.b16 %v773
    %v1136 = vunpack.c.l.b16 %v774
    %v1137 = vunpack.c.h.b16 %v774
    %v1138 = vunpack.c.l.b16 %v775
    %v1139 = vunpack.c.h.b16 %v775
    %v1140 = vunpack.c.l.b16 %v776
    %v1141 = vunpack.c.h.b16 %v776
    %v1142 = vunpack.c.l.b16 %v777
    %v1143 = vunpack.c.h.b16 %v777
    %v1144 = vunpack.c.l.b16 %v778
    %v1145 = vunpack.c.h.b16 %v778
    %v1146 = vunpack.c.l.b16 %v779
    %v1147 = vunpack.c.h.b16 %v779
    %v1148 = vunpack.c.l.b16 %v780
    %v1149 = vunpack.c.h.b16 %v780
    %v1150 = vunpack.c.l.b16 %v781
    %v1151 = vunpack.c.h.b16 %v781
    %v1152 = vunpack.c.l.b16 %v782
    %v1153 = vunpack.c.h.b16 %v782
    %v1154 = vunpack.c.l.b16 %v783
    %v1155 = vunpack.c.h.b16 %v783
    %v1156 = vunpack.c.l.b16 %v784
    %v1157 = vunpack.c.h.b16 %v784
    %v1158 = vunpack.c.l.b16 %v785
    %v1159 = vunpack.c.h.b16 %v785
    %v1160 = vunpack.c.l.b16 %v786
    %v1161 = vunpack.c.h.b16 %v786
    %v1162 = vunpack.c.l.b16 %v787
    %v1163 = vunpack.c.h.b16 %v787
    %v1164 = vunpack.c.l.b16 %v788
    %v1165 = vunpack.c.h.b16 %v788
    %v1166 = vunpack.c.l.b16 %v789
    %v1167 = vunpack.c.h.b16 %v789
    %v1168 = vunpack.c.l.b16 %v790
    %v1169 = vunpack.c.h.b16 %v790
    %v1170 = vunpack.c.l.b16 %v791
    %v1171 = vunpack.c.h.b16 %v791
    %v1172 = vunpack.c.l.b16 %v792
    %v1173 = vunpack.c.h.b16 %v792
    %v1174 = vunpack.c.l.b16 %v793
    %v1175 = vunpack.c.h.b16 %v793
    %v1176 = vunpack.c.l.b16 %v794
    %v1177 = vunpack.c.h.b16 %v794
    %v1178 = vunpack.c.l.b16 %v795
    %v1179 = vunpack.c.h.b16 %v795
    %v1180 = vunpack.c.l.b16 %v796
    %v1181 = vunpack.c.h.b16 %v796
    %v1182 = vunpack.c.l.b16 %v797
    %v1183 = vunpack.c.h.b16 %v797
    %v1184 = vunpack.c.l.b16 %v798
    %v1185 = vunpack.c.h.b16 %v798
    %v1186 = vunpack.c.l.b16 %v799
    %v1187 = vunpack.c.h.b16 %v799
    %v1188 = vunpack.c.l.b16 %v800
    %v1189 = vunpack.c.h.b16 %v800
    %v1190 = vunpack.c.l.b16 %v801
    %v1191 = vunpack.c.h.b16 %v801
    %v1192 = vunpack.c.l.b16 %v802
    %v1193 = vunpack.c.h.b16 %v802
    %v1194 = vunpack.c.l.b16 %v803
    %v1195 = vunpack.c.h.b16 %v803
    %v1196 = vunpack.c.l.b16 %v804
    %v1197 = vunpack.c.h.b16 %v804
    %v1198 = vunpack.c.l.b16 %v805
    %v1199 = vunpack.c.h.b16 %v805
    %v1200 = vpack.c.b16 %v948, %v944
    %v1201 = vpack.c.b16 %v949, %v945
    %v1202 = vpack.c.b16 %v950, %v946
    %v1203 = vpack.c.b16 %v951, %v947
    %v1204 = vpack.c.b16 %v956, %v952
    %v1205 = vpack.c.b16 %v957, %v953
    %v1206 = vpack.c.b16 %v958, %v954
    %v1207 = vpack.c.b16 %v959, %v955
    %v1208 = vpack.c.b16 %v964, %v960
    %v1209 = vpack.c.b16 %v965, %v961
    %v1210 = vpack.c.b16 %v966, %v962
    %v1211 = vpack.c.b16 %v967, %v963
    %v1212 = vpack.c.b16 %v972, %v968
    %v1213 = vpack.c.b16 %v973, %v969
    %v1214 = vpack.c.b16 %v974, %v970
    %v1215 = vpack.c.b16 %v975, %v971
    %v1216 = vpack.c.b16 %v980, %v976
    %v1217 = vpack.c.b16 %v981, %v977
    %v1218 = vpack.c.b16 %v982, %v978
    %v1219 = vpack.c.b16 %v983, %v979
    %v1220 = vpack.c.b16 %v988, %v984
    %v1221 = vpack.c.b16 %v989, %v985
    %v1222 = vpack.c.b16 %v990, %v986
    %v1223 = vpack.c.b16 %v991, %v987
    %v1224 = vpack.c.b16 %v996, %v992
    %v1225 = vpack.c.b16 %v997, %v993
    %v1226 = vpack.c.b16 %v998, %v994
    %v1227 = vpack.c.b16 %v999, %v995
    %v1228 = vpack.c.b16 %v1004, %v1000
    %v1229 = vpack.c.b16 %v1005, %v1001
    %v1230 = vpack.c.b16 %v1006, %v1002
    %v1231 = vpack.c.b16 %v1007, %v1003
    %v1232 = vpack.c.b16 %v1012, %v1008
    %v1233 = vpack.c.b16 %v1013, %v1009
    %v1234 = vpack.c.b16 %v1014, %v1010
    %v1235 = vpack.c.b16 %v1015, %v1011
    %v1236 = vpack.c.b16 %v1020, %v1016
    %v1237 = vpack.c.b16 %v1021, %v1017
    %v1238 = vpack.c.b16 %v1022, %v1018
    %v1239 = vpack.c.b16 %v1023, %v1019
    %v1240 = vpack.c.b16 %v1028, %v1024
    %v1241 = vpack.c.b16 %v1029, %v1025
    %v1242 = vpack.c.b16 %v1030, %v1026
    %v1243 = vpack.c.b16 %v1031, %v1027
    %v1244 = vpack.c.b16 %v1036, %v1032
    %v1245 = vpack.c.b16 %v1037, %v1033
    %v1246 = vpack.c.b16 %v1038, %v1034
    %v1247 = vpack.c.b16 %v1039, %v1035
    %v1248 = vpack.c.b16 %v1044, %v1040
    %v1249 = vpack.c.b16 %v1045, %v1041
    %v1250 = vpack.c.b16 %v1046, %v1042
    %v1251 = vpack.c.b16 %v1047, %v1043
    %v1252 = vpack.c.b16 %v1052, %v1048
    %v1253 = vpack.c.b16 %v1053, %v1049
    %v1254 = vpack.c.b16 %v1054, %v1050
    %v1255 = vpack.c.b16 %v1055, %v1051
    %v1256 = vpack.c.b16 %v1060, %v1056
    %v1257 = vpack.c.b16 %v1061, %v1057
    %v1258 = vpack.c.b16 %v1062, %v1058
    %v1259 = vpack.c.b16 %v1063, %v1059
    %v1260 = vpack.c.b16 %v1068, %v1064
    %v1261 = vpack.c.b16 %v1069, %v1065
    %v1262 = vpack.c.b16 %v1070, %v1066
    %v1263 = vpack.c.b16 %v1071, %v1067
    %v1264 = vpack.c.b16 %v1076, %v1072
    %v1265 = vpack.c.b16 %v1077, %v1073
    %v1266 = vpack.c.b16 %v1078, %v1074
    %v1267 = vpack.c.b16 %v1079, %v1075
    %v1268 = vpack.c.b16 %v1084, %v1080
    %v1269 = vpack.c.b16 %v1085, %v1081
    %v1270 = vpack.c.b16 %v1086, %v1082
    %v1271 = vpack.c.b16 %v1087, %v1083
    %v1272 = vpack.c.b16 %v1092, %v1088
    %v1273 = vpack.c.b16 %v1093, %v1089
    %v1274 = vpack.c.b16 %v1094, %v1090
    %v1275 = vpack.c.b16 %v1095, %v1091
    %v1276 = vpack.c.b16 %v1100, %v1096
    %v1277 = vpack.c.b16 %v1101, %v1097
    %v1278 = vpack.c.b16 %v1102, %v1098
    %v1279 = vpack.c.b16 %v1103, %v1099
    %v1280 = vpack.c.b16 %v1108, %v1104
    %v1281 = vpack.c.b16 %v1109, %v1105
    %v1282 = vpack.c.b16 %v1110, %v1106
    %v1283 = vpack.c.b16 %v1111, %v1107
    %v1284 = vpack.c.b16 %v1116, %v1112
    %v1285 = vpack.c.b16 %v1117, %v1113
    %v1286 = vpack.c.b16 %v1118, %v1114
    %v1287 = vpack.c.b16 %v1119, %v1115
    %v1288 = vpack.c.b16 %v1124, %v1120
    %v1289 = vpack.c.b16 %v1125, %v1121
    %v1290 = vpack.c.b16 %v1126, %v1122
    %v1291 = vpack.c.b16 %v1127, %v1123
    %v1292 = vpack.c.b16 %v1132, %v1128
    %v1293 = vpack.c.b16 %v1133, %v1129
    %v1294 = vpack.c.b16 %v1134, %v1130
    %v1295 = vpack.c.b16 %v1135, %v1131
    %v1296 = vpack.c.b16 %v1140, %v1136
    %v1297 = vpack.c.b16 %v1141, %v1137
    %v1298 = vpack.c.b16 %v1142, %v1138
    %v1299 = vpack.c.b16 %v1143, %v1139
    %v1300 = vpack.c.b16 %v1148, %v1144
    %v1301 = vpack.c.b16 %v1149, %v1145
    %v1302 = vpack.c.b16 %v1150, %v1146
    %v1303 = vpack.c.b16 %v1151, %v1147
    %v1304 = vpack.c.b16 %v1156, %v1152
    %v1305 = vpack.c.b16 %v1157, %v1153
    %v1306 = vpack.c.b16 %v1158, %v1154
    %v1307 = vpack.c.b16 %v1159, %v1155
    %v1308 = vpack.c.b16 %v1164, %v1160
    %v1309 = vpack.c.b16 %v1165, %v1161
    %v1310 = vpack.c.b16 %v1166, %v1162
    %v1311 = vpack.c.b16 %v1167, %v1163
    %v1312 = vpack.c.b16 %v1172, %v1168
    %v1313 = vpack.c.b16 %v1173, %v1169
    %v1314 = vpack.c.b16 %v1174, %v1170
    %v1315 = vpack.c.b16 %v1175, %v1171
    %v1316 = vpack.c.b16 %v1180, %v1176
    %v1317 = vpack.c.b16 %v1181, %v1177
    %v1318 = vpack.c.b16 %v1182, %v1178
    %v1319 = vpack.c.b16 %v1183, %v1179
    %v1320 = vpack.c.b16 %v1188, %v1184
    %v1321 = vpack.c.b16 %v1189, %v1185
    %v1322 = vpack.c.b16 %v1190, %v1186
    %v1323 = vpack.c.b16 %v1191, %v1187
    %v1324 = vpack.c.b16 %v1196, %v1192
    %v1325 = vpack.c.b16 %v1197, %v1193
    %v1326 = vpack.c.b16 %v1198, %v1194
    %v1327 = vpack.c.b16 %v1199, %v1195
    %1456 = vmatpush.bf16.msra.mxu0 %v1228
    %1457 = vmatpush.bf16.msra.mxu0 %v1224
    %1458 = vmatpush.bf16.msra.mxu0 %v1220
    %1459 = vmatpush.bf16.msra.mxu0 %v1216
    %1460 = vmatpush.bf16.msra.mxu0 %v1212
    %1461 = vmatpush.bf16.msra.mxu0 %v1208
    %1462 = vmatpush.bf16.msra.mxu0 %v1204
    %1463 = vmatpush.bf16.msra.mxu0 %v1200
    %1464 = vmatmul.bf16.gmra.mxu0 %v674
    %v1465 = vpop.f32.mrf.mxu0
    %v1466 = vadd.f32 %v808, %v1465
    %v1467 = vpop.f32.mrf.mxu0
    %1468 = vdwg.mxu0
    %1469 = vmatpush.bf16.msra.mxu0 %v1260
    %1470 = vmatpush.bf16.msra.mxu0 %v1256
    %1471 = vmatpush.bf16.msra.mxu0 %v1252
    %1472 = vmatpush.bf16.msra.mxu0 %v1248
    %1473 = vmatpush.bf16.msra.mxu0 %v1244
    %1474 = vmatpush.bf16.msra.mxu0 %v1240
    %1475 = vmatpush.bf16.msra.mxu0 %v1236
    %1476 = vmatpush.bf16.msra.mxu0 %v1232
    %1477 = vmatmul.bf16.gmra.mxu0 %v675
    %v1478 = vpop.f32.mrf.mxu0
    %v1479 = vadd.f32 %v1466, %v1478
    %v1480 = vpop.f32.mrf.mxu0
    %1481 = vdwg.mxu0
    %1482 = vmatpush.bf16.msra.mxu0 %v1292
    %1483 = vmatpush.bf16.msra.mxu0 %v1288
    %1484 = vmatpush.bf16.msra.mxu0 %v1284
    %1485 = vmatpush.bf16.msra.mxu0 %v1280
    %1486 = vmatpush.bf16.msra.mxu0 %v1276
    %1487 = vmatpush.bf16.msra.mxu0 %v1272
    %1488 = vmatpush.bf16.msra.mxu0 %v1268
    %1489 = vmatpush.bf16.msra.mxu0 %v1264
    %1490 = vmatmul.bf16.gmra.mxu0 %v676
    %v1491 = vpop.f32.mrf.mxu0
    %v1492 = vadd.f32 %v1479, %v1491
    %v1493 = vpop.f32.mrf.mxu0
    %1494 = vdwg.mxu0
    %1495 = vmatpush.bf16.msra.mxu0 %v1324
    %1496 = vmatpush.bf16.msra.mxu0 %v1320
    %1497 = vmatpush.bf16.msra.mxu0 %v1316
    %1498 = vmatpush.bf16.msra.mxu0 %v1312
    %1499 = vmatpush.bf16.msra.mxu0 %v1308
    %1500 = vmatpush.bf16.msra.mxu0 %v1304
    %1501 = vmatpush.bf16.msra.mxu0 %v1300
    %1502 = vmatpush.bf16.msra.mxu0 %v1296
    %1503 = vmatmul.bf16.gmra.mxu0 %v677
    %v1504 = vpop.f32.mrf.mxu0
    %v1505 = vadd.f32 %v1492, %v1504
    %v1506 = vpop.f32.mrf.mxu0
    %1507 = vdwg.mxu0
    %1508 = vmatpush.bf16.msra.mxu0 %v1229
    %1509 = vmatpush.bf16.msra.mxu0 %v1225
    %1510 = vmatpush.bf16.msra.mxu0 %v1221
    %1511 = vmatpush.bf16.msra.mxu0 %v1217
    %1512 = vmatpush.bf16.msra.mxu0 %v1213
    %1513 = vmatpush.bf16.msra.mxu0 %v1209
    %1514 = vmatpush.bf16.msra.mxu0 %v1205
    %1515 = vmatpush.bf16.msra.mxu0 %v1201
    %1516 = vmatmul.bf16.gmra.mxu0 %v674
    %v1517 = vpop.f32.mrf.mxu0
    %v1518 = vadd.f32 %v809, %v1517
    %v1519 = vpop.f32.mrf.mxu0
    %1520 = vdwg.mxu0
    %1521 = vmatpush.bf16.msra.mxu0 %v1261
    %1522 = vmatpush.bf16.msra.mxu0 %v1257
    %1523 = vmatpush.bf16.msra.mxu0 %v1253
    %1524 = vmatpush.bf16.msra.mxu0 %v1249
    %1525 = vmatpush.bf16.msra.mxu0 %v1245
    %1526 = vmatpush.bf16.msra.mxu0 %v1241
    %1527 = vmatpush.bf16.msra.mxu0 %v1237
    %1528 = vmatpush.bf16.msra.mxu0 %v1233
    %1529 = vmatmul.bf16.gmra.mxu0 %v675
    %v1530 = vpop.f32.mrf.mxu0
    %v1531 = vadd.f32 %v1518, %v1530
    %v1532 = vpop.f32.mrf.mxu0
    %1533 = vdwg.mxu0
    %1534 = vmatpush.bf16.msra.mxu0 %v1293
    %1535 = vmatpush.bf16.msra.mxu0 %v1289
    %1536 = vmatpush.bf16.msra.mxu0 %v1285
    %1537 = vmatpush.bf16.msra.mxu0 %v1281
    %1538 = vmatpush.bf16.msra.mxu0 %v1277
    %1539 = vmatpush.bf16.msra.mxu0 %v1273
    %1540 = vmatpush.bf16.msra.mxu0 %v1269
    %1541 = vmatpush.bf16.msra.mxu0 %v1265
    %1542 = vmatmul.bf16.gmra.mxu0 %v676
    %v1543 = vpop.f32.mrf.mxu0
    %v1544 = vadd.f32 %v1531, %v1543
    %v1545 = vpop.f32.mrf.mxu0
    %1546 = vdwg.mxu0
    %1547 = vmatpush.bf16.msra.mxu0 %v1325
    %1548 = vmatpush.bf16.msra.mxu0 %v1321
    %1549 = vmatpush.bf16.msra.mxu0 %v1317
    %1550 = vmatpush.bf16.msra.mxu0 %v1313
    %1551 = vmatpush.bf16.msra.mxu0 %v1309
    %1552 = vmatpush.bf16.msra.mxu0 %v1305
    %1553 = vmatpush.bf16.msra.mxu0 %v1301
    %1554 = vmatpush.bf16.msra.mxu0 %v1297
    %1555 = vmatmul.bf16.gmra.mxu0 %v677
    %v1556 = vpop.f32.mrf.mxu0
    %v1557 = vadd.f32 %v1544, %v1556
    %v1558 = vpop.f32.mrf.mxu0
    %1559 = vdwg.mxu0
    %1560 = vmatpush.bf16.msra.mxu0 %v1230
    %1561 = vmatpush.bf16.msra.mxu0 %v1226
    %1562 = vmatpush.bf16.msra.mxu0 %v1222
    %1563 = vmatpush.bf16.msra.mxu0 %v1218
    %1564 = vmatpush.bf16.msra.mxu0 %v1214
    %1565 = vmatpush.bf16.msra.mxu0 %v1210
    %1566 = vmatpush.bf16.msra.mxu0 %v1206
    %1567 = vmatpush.bf16.msra.mxu0 %v1202
    %1568 = vmatmul.bf16.gmra.mxu0 %v674
    %v1569 = vpop.f32.mrf.mxu0
    %v1570 = vadd.f32 %v810, %v1569
    %v1571 = vpop.f32.mrf.mxu0
    %1572 = vdwg.mxu0
    %1573 = vmatpush.bf16.msra.mxu0 %v1262
    %1574 = vmatpush.bf16.msra.mxu0 %v1258
    %1575 = vmatpush.bf16.msra.mxu0 %v1254
    %1576 = vmatpush.bf16.msra.mxu0 %v1250
    %1577 = vmatpush.bf16.msra.mxu0 %v1246
    %1578 = vmatpush.bf16.msra.mxu0 %v1242
    %1579 = vmatpush.bf16.msra.mxu0 %v1238
    %1580 = vmatpush.bf16.msra.mxu0 %v1234
    %1581 = vmatmul.bf16.gmra.mxu0 %v675
    %v1582 = vpop.f32.mrf.mxu0
    %v1583 = vadd.f32 %v1570, %v1582
    %v1584 = vpop.f32.mrf.mxu0
    %1585 = vdwg.mxu0
    %1586 = vmatpush.bf16.msra.mxu0 %v1294
    %1587 = vmatpush.bf16.msra.mxu0 %v1290
    %1588 = vmatpush.bf16.msra.mxu0 %v1286
    %1589 = vmatpush.bf16.msra.mxu0 %v1282
    %1590 = vmatpush.bf16.msra.mxu0 %v1278
    %1591 = vmatpush.bf16.msra.mxu0 %v1274
    %1592 = vmatpush.bf16.msra.mxu0 %v1270
    %1593 = vmatpush.bf16.msra.mxu0 %v1266
    %1594 = vmatmul.bf16.gmra.mxu0 %v676
    %v1595 = vpop.f32.mrf.mxu0
    %v1596 = vadd.f32 %v1583, %v1595
    %v1597 = vpop.f32.mrf.mxu0
    %1598 = vdwg.mxu0
    %1599 = vmatpush.bf16.msra.mxu0 %v1326
    %1600 = vmatpush.bf16.msra.mxu0 %v1322
    %1601 = vmatpush.bf16.msra.mxu0 %v1318
    %1602 = vmatpush.bf16.msra.mxu0 %v1314
    %1603 = vmatpush.bf16.msra.mxu0 %v1310
    %1604 = vmatpush.bf16.msra.mxu0 %v1306
    %1605 = vmatpush.bf16.msra.mxu0 %v1302
    %1606 = vmatpush.bf16.msra.mxu0 %v1298
    %1607 = vmatmul.bf16.gmra.mxu0 %v677
    %v1608 = vpop.f32.mrf.mxu0
    %v1609 = vadd.f32 %v1596, %v1608
    %v1610 = vpop.f32.mrf.mxu0
    %1611 = vdwg.mxu0
    %1612 = vmatpush.bf16.msra.mxu0 %v1231
    %1613 = vmatpush.bf16.msra.mxu0 %v1227
    %1614 = vmatpush.bf16.msra.mxu0 %v1223
    %1615 = vmatpush.bf16.msra.mxu0 %v1219
    %1616 = vmatpush.bf16.msra.mxu0 %v1215
    %1617 = vmatpush.bf16.msra.mxu0 %v1211
    %1618 = vmatpush.bf16.msra.mxu0 %v1207
    %1619 = vmatpush.bf16.msra.mxu0 %v1203
    %1620 = vmatmul.bf16.gmra.mxu0 %v674
    %v1621 = vpop.f32.mrf.mxu0
    %v1622 = vadd.f32 %v811, %v1621
    %v1623 = vpop.f32.mrf.mxu0
    %1624 = vdwg.mxu0
    %1625 = vmatpush.bf16.msra.mxu0 %v1263
    %1626 = vmatpush.bf16.msra.mxu0 %v1259
    %1627 = vmatpush.bf16.msra.mxu0 %v1255
    %1628 = vmatpush.bf16.msra.mxu0 %v1251
    %1629 = vmatpush.bf16.msra.mxu0 %v1247
    %1630 = vmatpush.bf16.msra.mxu0 %v1243
    %1631 = vmatpush.bf16.msra.mxu0 %v1239
    %1632 = vmatpush.bf16.msra.mxu0 %v1235
    %1633 = vmatmul.bf16.gmra.mxu0 %v675
    %v1634 = vpop.f32.mrf.mxu0
    %v1635 = vadd.f32 %v1622, %v1634
    %v1636 = vpop.f32.mrf.mxu0
    %1637 = vdwg.mxu0
    %1638 = vmatpush.bf16.msra.mxu0 %v1295
    %1639 = vmatpush.bf16.msra.mxu0 %v1291
    %1640 = vmatpush.bf16.msra.mxu0 %v1287
    %1641 = vmatpush.bf16.msra.mxu0 %v1283
    %1642 = vmatpush.bf16.msra.mxu0 %v1279
    %1643 = vmatpush.bf16.msra.mxu0 %v1275
    %1644 = vmatpush.bf16.msra.mxu0 %v1271
    %1645 = vmatpush.bf16.msra.mxu0 %v1267
    %1646 = vmatmul.bf16.gmra.mxu0 %v676
    %v1647 = vpop.f32.mrf.mxu0
    %v1648 = vadd.f32 %v1635, %v1647
    %v1649 = vpop.f32.mrf.mxu0
    %1650 = vdwg.mxu0
    %1651 = vmatpush.bf16.msra.mxu0 %v1327
    %1652 = vmatpush.bf16.msra.mxu0 %v1323
    %1653 = vmatpush.bf16.msra.mxu0 %v1319
    %1654 = vmatpush.bf16.msra.mxu0 %v1315
    %1655 = vmatpush.bf16.msra.mxu0 %v1311
    %1656 = vmatpush.bf16.msra.mxu0 %v1307
    %1657 = vmatpush.bf16.msra.mxu0 %v1303
    %1658 = vmatpush.bf16.msra.mxu0 %v1299
    %1659 = vmatmul.bf16.gmra.mxu0 %v677
    %v1660 = vpop.f32.mrf.mxu0
    %v1661 = vadd.f32 %v1648, %v1660
    %v1662 = vpop.f32.mrf.mxu0
    %1663 = vdwg.mxu0
    %v1664 = vmax.f32 %v1505, 0.0
    %v1665 = vmax.f32 %v1557, 0.0
    %v1666 = vmax.f32 %v1609, 0.0
    %v1667 = vmax.f32 %v1661, 0.0
    %v1668 = vpack.c.bf16 %v1664, %v1664
    %v1669 = vpack.c.bf16 %v1665, %v1665
    %v1670 = vpack.c.bf16 %v1666, %v1666
    %v1671 = vpack.c.bf16 %v1667, %v1667
    %v1672 = vld [vmem:[%s7] sm:$0xff]
    %v1673 = vld [vmem:[%s7 + $0x8] sm:$0xff]
    %v1674 = vld [vmem:[%s7 + $0x10] sm:$0xff]
    %v1675 = vld [vmem:[%s7 + $0x18] sm:$0xff]
    %v1676 = vld [vmem:[%s7 + $0x20] sm:$0xff]
    %v1677 = vld [vmem:[%s7 + $0x28] sm:$0xff]
    %v1678 = vld [vmem:[%s7 + $0x30] sm:$0xff]
    %v1679 = vld [vmem:[%s7 + $0x38] sm:$0xff]
    %v1680 = vld [vmem:[%s7 + $0x40] sm:$0xff]
    %v1681 = vld [vmem:[%s7 + $0x48] sm:$0xff]
    %v1682 = vld [vmem:[%s7 + $0x50] sm:$0xff]
    %v1683 = vld [vmem:[%s7 + $0x58] sm:$0xff]
    %v1684 = vld [vmem:[%s7 + $0x60] sm:$0xff]
    %v1685 = vld [vmem:[%s7 + $0x68] sm:$0xff]
    %v1686 = vld [vmem:[%s7 + $0x70] sm:$0xff]
    %v1687 = vld [vmem:[%s7 + $0x78] sm:$0xff]
    %v1688 = vld [vmem:[%s7 + $0x80] sm:$0xff]
    %v1689 = vld [vmem:[%s7 + $0x88] sm:$0xff]
    %v1690 = vld [vmem:[%s7 + $0x90] sm:$0xff]
    %v1691 = vld [vmem:[%s7 + $0x98] sm:$0xff]
    %v1692 = vld [vmem:[%s7 + $0xa0] sm:$0xff]
    %v1693 = vld [vmem:[%s7 + $0xa8] sm:$0xff]
    %v1694 = vld [vmem:[%s7 + $0xb0] sm:$0xff]
    %v1695 = vld [vmem:[%s7 + $0xb8] sm:$0xff]
    %v1696 = vld [vmem:[%s7 + $0xc0] sm:$0xff]
    %v1697 = vld [vmem:[%s7 + $0xc8] sm:$0xff]
    %v1698 = vld [vmem:[%s7 + $0xd0] sm:$0xff]
    %v1699 = vld [vmem:[%s7 + $0xd8] sm:$0xff]
    %v1700 = vld [vmem:[%s7 + $0xe0] sm:$0xff]
    %v1701 = vld [vmem:[%s7 + $0xe8] sm:$0xff]
    %v1702 = vld [vmem:[%s7 + $0xf0] sm:$0xff]
    %v1703 = vld [vmem:[%s7 + $0xf8] sm:$0xff]
    %v1704 = vld [vmem:[%s7 + $0x100] sm:$0xff]
    %v1705 = vld [vmem:[%s7 + $0x108] sm:$0xff]
    %v1706 = vld [vmem:[%s7 + $0x110] sm:$0xff]
    %v1707 = vld [vmem:[%s7 + $0x118] sm:$0xff]
    %v1708 = vld [vmem:[%s7 + $0x120] sm:$0xff]
    %v1709 = vld [vmem:[%s7 + $0x128] sm:$0xff]
    %v1710 = vld [vmem:[%s7 + $0x130] sm:$0xff]
    %v1711 = vld [vmem:[%s7 + $0x138] sm:$0xff]
    %v1712 = vld [vmem:[%s7 + $0x140] sm:$0xff]
    %v1713 = vld [vmem:[%s7 + $0x148] sm:$0xff]
    %v1714 = vld [vmem:[%s7 + $0x150] sm:$0xff]
    %v1715 = vld [vmem:[%s7 + $0x158] sm:$0xff]
    %v1716 = vld [vmem:[%s7 + $0x160] sm:$0xff]
    %v1717 = vld [vmem:[%s7 + $0x168] sm:$0xff]
    %v1718 = vld [vmem:[%s7 + $0x170] sm:$0xff]
    %v1719 = vld [vmem:[%s7 + $0x178] sm:$0xff]
    %v1720 = vld [vmem:[%s7 + $0x180] sm:$0xff]
    %v1721 = vld [vmem:[%s7 + $0x188] sm:$0xff]
    %v1722 = vld [vmem:[%s7 + $0x190] sm:$0xff]
    %v1723 = vld [vmem:[%s7 + $0x198] sm:$0xff]
    %v1724 = vld [vmem:[%s7 + $0x1a0] sm:$0xff]
    %v1725 = vld [vmem:[%s7 + $0x1a8] sm:$0xff]
    %v1726 = vld [vmem:[%s7 + $0x1b0] sm:$0xff]
    %v1727 = vld [vmem:[%s7 + $0x1b8] sm:$0xff]
    %v1728 = vld [vmem:[%s7 + $0x1c0] sm:$0xff]
    %v1729 = vld [vmem:[%s7 + $0x1c8] sm:$0xff]
    %v1730 = vld [vmem:[%s7 + $0x1d0] sm:$0xff]
    %v1731 = vld [vmem:[%s7 + $0x1d8] sm:$0xff]
    %v1732 = vld [vmem:[%s7 + $0x1e0] sm:$0xff]
    %v1733 = vld [vmem:[%s7 + $0x1e8] sm:$0xff]
    %v1734 = vld [vmem:[%s7 + $0x1f0] sm:$0xff]
    %v1735 = vld [vmem:[%s7 + $0x1f8] sm:$0xff]
    %v1736 = vld [vmem:[%s8] sm:$0x3]
    %v1738 = vperm.slane %v1736, 0
    %v1739 = vperm.slane %v1736, 1
    %v1806 = vunpack.c.l.b16 %v1672
    %v1807 = vunpack.c.h.b16 %v1672
    %v1808 = vunpack.c.l.b16 %v1673
    %v1809 = vunpack.c.h.b16 %v1673
    %v1810 = vunpack.c.l.b16 %v1674
    %v1811 = vunpack.c.h.b16 %v1674
    %v1812 = vunpack.c.l.b16 %v1675
    %v1813 = vunpack.c.h.b16 %v1675
    %v1814 = vunpack.c.l.b16 %v1676
    %v1815 = vunpack.c.h.b16 %v1676
    %v1816 = vunpack.c.l.b16 %v1677
    %v1817 = vunpack.c.h.b16 %v1677
    %v1818 = vunpack.c.l.b16 %v1678
    %v1819 = vunpack.c.h.b16 %v1678
    %v1820 = vunpack.c.l.b16 %v1679
    %v1821 = vunpack.c.h.b16 %v1679
    %v1822 = vunpack.c.l.b16 %v1680
    %v1823 = vunpack.c.h.b16 %v1680
    %v1824 = vunpack.c.l.b16 %v1681
    %v1825 = vunpack.c.h.b16 %v1681
    %v1826 = vunpack.c.l.b16 %v1682
    %v1827 = vunpack.c.h.b16 %v1682
    %v1828 = vunpack.c.l.b16 %v1683
    %v1829 = vunpack.c.h.b16 %v1683
    %v1830 = vunpack.c.l.b16 %v1684
    %v1831 = vunpack.c.h.b16 %v1684
    %v1832 = vunpack.c.l.b16 %v1685
    %v1833 = vunpack.c.h.b16 %v1685
    %v1834 = vunpack.c.l.b16 %v1686
    %v1835 = vunpack.c.h.b16 %v1686
    %v1836 = vunpack.c.l.b16 %v1687
    %v1837 = vunpack.c.h.b16 %v1687
    %v1838 = vunpack.c.l.b16 %v1688
    %v1839 = vunpack.c.h.b16 %v1688
    %v1840 = vunpack.c.l.b16 %v1689
    %v1841 = vunpack.c.h.b16 %v1689
    %v1842 = vunpack.c.l.b16 %v1690
    %v1843 = vunpack.c.h.b16 %v1690
    %v1844 = vunpack.c.l.b16 %v1691
    %v1845 = vunpack.c.h.b16 %v1691
    %v1846 = vunpack.c.l.b16 %v1692
    %v1847 = vunpack.c.h.b16 %v1692
    %v1848 = vunpack.c.l.b16 %v1693
    %v1849 = vunpack.c.h.b16 %v1693
    %v1850 = vunpack.c.l.b16 %v1694
    %v1851 = vunpack.c.h.b16 %v1694
    %v1852 = vunpack.c.l.b16 %v1695
    %v1853 = vunpack.c.h.b16 %v1695
    %v1854 = vunpack.c.l.b16 %v1696
    %v1855 = vunpack.c.h.b16 %v1696
    %v1856 = vunpack.c.l.b16 %v1697
    %v1857 = vunpack.c.h.b16 %v1697
    %v1858 = vunpack.c.l.b16 %v1698
    %v1859 = vunpack.c.h.b16 %v1698
    %v1860 = vunpack.c.l.b16 %v1699
    %v1861 = vunpack.c.h.b16 %v1699
    %v1862 = vunpack.c.l.b16 %v1700
    %v1863 = vunpack.c.h.b16 %v1700
    %v1864 = vunpack.c.l.b16 %v1701
    %v1865 = vunpack.c.h.b16 %v1701
    %v1866 = vunpack.c.l.b16 %v1702
    %v1867 = vunpack.c.h.b16 %v1702
    %v1868 = vunpack.c.l.b16 %v1703
    %v1869 = vunpack.c.h.b16 %v1703
    %v1870 = vunpack.c.l.b16 %v1704
    %v1871 = vunpack.c.h.b16 %v1704
    %v1872 = vunpack.c.l.b16 %v1705
    %v1873 = vunpack.c.h.b16 %v1705
    %v1874 = vunpack.c.l.b16 %v1706
    %v1875 = vunpack.c.h.b16 %v1706
    %v1876 = vunpack.c.l.b16 %v1707
    %v1877 = vunpack.c.h.b16 %v1707
    %v1878 = vunpack.c.l.b16 %v1708
    %v1879 = vunpack.c.h.b16 %v1708
    %v1880 = vunpack.c.l.b16 %v1709
    %v1881 = vunpack.c.h.b16 %v1709
    %v1882 = vunpack.c.l.b16 %v1710
    %v1883 = vunpack.c.h.b16 %v1710
    %v1884 = vunpack.c.l.b16 %v1711
    %v1885 = vunpack.c.h.b16 %v1711
    %v1886 = vunpack.c.l.b16 %v1712
    %v1887 = vunpack.c.h.b16 %v1712
    %v1888 = vunpack.c.l.b16 %v1713
    %v1889 = vunpack.c.h.b16 %v1713
    %v1890 = vunpack.c.l.b16 %v1714
    %v1891 = vunpack.c.h.b16 %v1714
    %v1892 = vunpack.c.l.b16 %v1715
    %v1893 = vunpack.c.h.b16 %v1715
    %v1894 = vunpack.c.l.b16 %v1716
    %v1895 = vunpack.c.h.b16 %v1716
    %v1896 = vunpack.c.l.b16 %v1717
    %v1897 = vunpack.c.h.b16 %v1717
    %v1898 = vunpack.c.l.b16 %v1718
    %v1899 = vunpack.c.h.b16 %v1718
    %v1900 = vunpack.c.l.b16 %v1719
    %v1901 = vunpack.c.h.b16 %v1719
    %v1902 = vunpack.c.l.b16 %v1720
    %v1903 = vunpack.c.h.b16 %v1720
    %v1904 = vunpack.c.l.b16 %v1721
    %v1905 = vunpack.c.h.b16 %v1721
    %v1906 = vunpack.c.l.b16 %v1722
    %v1907 = vunpack.c.h.b16 %v1722
    %v1908 = vunpack.c.l.b16 %v1723
    %v1909 = vunpack.c.h.b16 %v1723
    %v1910 = vunpack.c.l.b16 %v1724
    %v1911 = vunpack.c.h.b16 %v1724
    %v1912 = vunpack.c.l.b16 %v1725
    %v1913 = vunpack.c.h.b16 %v1725
    %v1914 = vunpack.c.l.b16 %v1726
    %v1915 = vunpack.c.h.b16 %v1726
    %v1916 = vunpack.c.l.b16 %v1727
    %v1917 = vunpack.c.h.b16 %v1727
    %v1918 = vunpack.c.l.b16 %v1728
    %v1919 = vunpack.c.h.b16 %v1728
    %v1920 = vunpack.c.l.b16 %v1729
    %v1921 = vunpack.c.h.b16 %v1729
    %v1922 = vunpack.c.l.b16 %v1730
    %v1923 = vunpack.c.h.b16 %v1730
    %v1924 = vunpack.c.l.b16 %v1731
    %v1925 = vunpack.c.h.b16 %v1731
    %v1926 = vunpack.c.l.b16 %v1732
    %v1927 = vunpack.c.h.b16 %v1732
    %v1928 = vunpack.c.l.b16 %v1733
    %v1929 = vunpack.c.h.b16 %v1733
    %v1930 = vunpack.c.l.b16 %v1734
    %v1931 = vunpack.c.h.b16 %v1734
    %v1932 = vunpack.c.l.b16 %v1735
    %v1933 = vunpack.c.h.b16 %v1735
    %v1934 = vpack.c.b16 %v1808, %v1806
    %v1935 = vpack.c.b16 %v1809, %v1807
    %v1936 = vpack.c.b16 %v1812, %v1810
    %v1937 = vpack.c.b16 %v1813, %v1811
    %v1938 = vpack.c.b16 %v1816, %v1814
    %v1939 = vpack.c.b16 %v1817, %v1815
    %v1940 = vpack.c.b16 %v1820, %v1818
    %v1941 = vpack.c.b16 %v1821, %v1819
    %v1942 = vpack.c.b16 %v1824, %v1822
    %v1943 = vpack.c.b16 %v1825, %v1823
    %v1944 = vpack.c.b16 %v1828, %v1826
    %v1945 = vpack.c.b16 %v1829, %v1827
    %v1946 = vpack.c.b16 %v1832, %v1830
    %v1947 = vpack.c.b16 %v1833, %v1831
    %v1948 = vpack.c.b16 %v1836, %v1834
    %v1949 = vpack.c.b16 %v1837, %v1835
    %v1950 = vpack.c.b16 %v1840, %v1838
    %v1951 = vpack.c.b16 %v1841, %v1839
    %v1952 = vpack.c.b16 %v1844, %v1842
    %v1953 = vpack.c.b16 %v1845, %v1843
    %v1954 = vpack.c.b16 %v1848, %v1846
    %v1955 = vpack.c.b16 %v1849, %v1847
    %v1956 = vpack.c.b16 %v1852, %v1850
    %v1957 = vpack.c.b16 %v1853, %v1851
    %v1958 = vpack.c.b16 %v1856, %v1854
    %v1959 = vpack.c.b16 %v1857, %v1855
    %v1960 = vpack.c.b16 %v1860, %v1858
    %v1961 = vpack.c.b16 %v1861, %v1859
    %v1962 = vpack.c.b16 %v1864, %v1862
    %v1963 = vpack.c.b16 %v1865, %v1863
    %v1964 = vpack.c.b16 %v1868, %v1866
    %v1965 = vpack.c.b16 %v1869, %v1867
    %v1966 = vpack.c.b16 %v1872, %v1870
    %v1967 = vpack.c.b16 %v1873, %v1871
    %v1968 = vpack.c.b16 %v1876, %v1874
    %v1969 = vpack.c.b16 %v1877, %v1875
    %v1970 = vpack.c.b16 %v1880, %v1878
    %v1971 = vpack.c.b16 %v1881, %v1879
    %v1972 = vpack.c.b16 %v1884, %v1882
    %v1973 = vpack.c.b16 %v1885, %v1883
    %v1974 = vpack.c.b16 %v1888, %v1886
    %v1975 = vpack.c.b16 %v1889, %v1887
    %v1976 = vpack.c.b16 %v1892, %v1890
    %v1977 = vpack.c.b16 %v1893, %v1891
    %v1978 = vpack.c.b16 %v1896, %v1894
    %v1979 = vpack.c.b16 %v1897, %v1895
    %v1980 = vpack.c.b16 %v1900, %v1898
    %v1981 = vpack.c.b16 %v1901, %v1899
    %v1982 = vpack.c.b16 %v1904, %v1902
    %v1983 = vpack.c.b16 %v1905, %v1903
    %v1984 = vpack.c.b16 %v1908, %v1906
    %v1985 = vpack.c.b16 %v1909, %v1907
    %v1986 = vpack.c.b16 %v1912, %v1910
    %v1987 = vpack.c.b16 %v1913, %v1911
    %v1988 = vpack.c.b16 %v1916, %v1914
    %v1989 = vpack.c.b16 %v1917, %v1915
    %v1990 = vpack.c.b16 %v1920, %v1918
    %v1991 = vpack.c.b16 %v1921, %v1919
    %v1992 = vpack.c.b16 %v1924, %v1922
    %v1993 = vpack.c.b16 %v1925, %v1923
    %v1994 = vpack.c.b16 %v1928, %v1926
    %v1995 = vpack.c.b16 %v1929, %v1927
    %v1996 = vpack.c.b16 %v1932, %v1930
    %v1997 = vpack.c.b16 %v1933, %v1931
    %2062 = vmatpush.bf16.msra.mxu0 %v1948
    %2063 = vmatpush.bf16.msra.mxu0 %v1946
    %2064 = vmatpush.bf16.msra.mxu0 %v1944
    %2065 = vmatpush.bf16.msra.mxu0 %v1942
    %2066 = vmatpush.bf16.msra.mxu0 %v1940
    %2067 = vmatpush.bf16.msra.mxu0 %v1938
    %2068 = vmatpush.bf16.msra.mxu0 %v1936
    %2069 = vmatpush.bf16.msra.mxu0 %v1934
    %2070 = vmatmul.bf16.gmra.mxu0 %v1668
    %v2071 = vpop.f32.mrf.mxu0
    %v2072 = vadd.f32 %v1738, %v2071
    %v2073 = vpop.f32.mrf.mxu0
    %2074 = vdwg.mxu0
    %2075 = vmatpush.bf16.msra.mxu0 %v1964
    %2076 = vmatpush.bf16.msra.mxu0 %v1962
    %2077 = vmatpush.bf16.msra.mxu0 %v1960
    %2078 = vmatpush.bf16.msra.mxu0 %v1958
    %2079 = vmatpush.bf16.msra.mxu0 %v1956
    %2080 = vmatpush.bf16.msra.mxu0 %v1954
    %2081 = vmatpush.bf16.msra.mxu0 %v1952
    %2082 = vmatpush.bf16.msra.mxu0 %v1950
    %2083 = vmatmul.bf16.gmra.mxu0 %v1669
    %v2084 = vpop.f32.mrf.mxu0
    %v2085 = vadd.f32 %v2072, %v2084
    %v2086 = vpop.f32.mrf.mxu0
    %2087 = vdwg.mxu0
    %2088 = vmatpush.bf16.msra.mxu0 %v1980
    %2089 = vmatpush.bf16.msra.mxu0 %v1978
    %2090 = vmatpush.bf16.msra.mxu0 %v1976
    %2091 = vmatpush.bf16.msra.mxu0 %v1974
    %2092 = vmatpush.bf16.msra.mxu0 %v1972
    %2093 = vmatpush.bf16.msra.mxu0 %v1970
    %2094 = vmatpush.bf16.msra.mxu0 %v1968
    %2095 = vmatpush.bf16.msra.mxu0 %v1966
    %2096 = vmatmul.bf16.gmra.mxu0 %v1670
    %v2097 = vpop.f32.mrf.mxu0
    %v2098 = vadd.f32 %v2085, %v2097
    %v2099 = vpop.f32.mrf.mxu0
    %2100 = vdwg.mxu0
    %2101 = vmatpush.bf16.msra.mxu0 %v1996
    %2102 = vmatpush.bf16.msra.mxu0 %v1994
    %2103 = vmatpush.bf16.msra.mxu0 %v1992
    %2104 = vmatpush.bf16.msra.mxu0 %v1990
    %2105 = vmatpush.bf16.msra.mxu0 %v1988
    %2106 = vmatpush.bf16.msra.mxu0 %v1986
    %2107 = vmatpush.bf16.msra.mxu0 %v1984
    %2108 = vmatpush.bf16.msra.mxu0 %v1982
    %2109 = vmatmul.bf16.gmra.mxu0 %v1671
    %v2110 = vpop.f32.mrf.mxu0
    %v2111 = vadd.f32 %v2098, %v2110
    %v2112 = vpop.f32.mrf.mxu0
    %2113 = vdwg.mxu0
    %2114 = vmatpush.bf16.msra.mxu0 %v1949
    %2115 = vmatpush.bf16.msra.mxu0 %v1947
    %2116 = vmatpush.bf16.msra.mxu0 %v1945
    %2117 = vmatpush.bf16.msra.mxu0 %v1943
    %2118 = vmatpush.bf16.msra.mxu0 %v1941
    %2119 = vmatpush.bf16.msra.mxu0 %v1939
    %2120 = vmatpush.bf16.msra.mxu0 %v1937
    %2121 = vmatpush.bf16.msra.mxu0 %v1935
    %2122 = vmatmul.bf16.gmra.mxu0 %v1668
    %v2123 = vpop.f32.mrf.mxu0
    %v2124 = vadd.f32 %v1739, %v2123
    %v2125 = vpop.f32.mrf.mxu0
    %2126 = vdwg.mxu0
    %2127 = vmatpush.bf16.msra.mxu0 %v1965
    %2128 = vmatpush.bf16.msra.mxu0 %v1963
    %2129 = vmatpush.bf16.msra.mxu0 %v1961
    %2130 = vmatpush.bf16.msra.mxu0 %v1959
    %2131 = vmatpush.bf16.msra.mxu0 %v1957
    %2132 = vmatpush.bf16.msra.mxu0 %v1955
    %2133 = vmatpush.bf16.msra.mxu0 %v1953
    %2134 = vmatpush.bf16.msra.mxu0 %v1951
    %2135 = vmatmul.bf16.gmra.mxu0 %v1669
    %v2136 = vpop.f32.mrf.mxu0
    %v2137 = vadd.f32 %v2124, %v2136
    %v2138 = vpop.f32.mrf.mxu0
    %2139 = vdwg.mxu0
    %2140 = vmatpush.bf16.msra.mxu0 %v1981
    %2141 = vmatpush.bf16.msra.mxu0 %v1979
    %2142 = vmatpush.bf16.msra.mxu0 %v1977
    %2143 = vmatpush.bf16.msra.mxu0 %v1975
    %2144 = vmatpush.bf16.msra.mxu0 %v1973
    %2145 = vmatpush.bf16.msra.mxu0 %v1971
    %2146 = vmatpush.bf16.msra.mxu0 %v1969
    %2147 = vmatpush.bf16.msra.mxu0 %v1967
    %2148 = vmatmul.bf16.gmra.mxu0 %v1670
    %v2149 = vpop.f32.mrf.mxu0
    %v2150 = vadd.f32 %v2137, %v2149
    %v2151 = vpop.f32.mrf.mxu0
    %2152 = vdwg.mxu0
    %2153 = vmatpush.bf16.msra.mxu0 %v1997
    %2154 = vmatpush.bf16.msra.mxu0 %v1995
    %2155 = vmatpush.bf16.msra.mxu0 %v1993
    %2156 = vmatpush.bf16.msra.mxu0 %v1991
    %2157 = vmatpush.bf16.msra.mxu0 %v1989
    %2158 = vmatpush.bf16.msra.mxu0 %v1987
    %2159 = vmatpush.bf16.msra.mxu0 %v1985
    %2160 = vmatpush.bf16.msra.mxu0 %v1983
    %2161 = vmatmul.bf16.gmra.mxu0 %v1671
    %v2162 = vpop.f32.mrf.mxu0
    %v2163 = vadd.f32 %v2150, %v2162
    %v2164 = vpop.f32.mrf.mxu0
    %2165 = vdwg.mxu0
    %v2166 = vmax.f32 %v2111, 0.0
    %v2167 = vmax.f32 %v2163, 0.0
    %v2168 = vpack.c.bf16 %v2166, %v2166
    %v2169 = vpack.c.bf16 %v2167, %v2167
    %v2170 = vld [vmem:[%s9] sm:$0xf]
    %v2171 = vld [vmem:[%s9 + $0x4] sm:$0xf]
    %v2172 = vld [vmem:[%s9 + $0x8] sm:$0xf]
    %v2173 = vld [vmem:[%s9 + $0xc] sm:$0xf]
    %v2174 = vld [vmem:[%s9 + $0x10] sm:$0xf]
    %v2175 = vld [vmem:[%s9 + $0x14] sm:$0xf]
    %v2176 = vld [vmem:[%s9 + $0x18] sm:$0xf]
    %v2177 = vld [vmem:[%s9 + $0x1c] sm:$0xf]
    %v2178 = vld [vmem:[%s9 + $0x20] sm:$0xf]
    %v2179 = vld [vmem:[%s9 + $0x24] sm:$0xf]
    %v2180 = vld [vmem:[%s9 + $0x28] sm:$0xf]
    %v2181 = vld [vmem:[%s9 + $0x2c] sm:$0xf]
    %v2182 = vld [vmem:[%s9 + $0x30] sm:$0xf]
    %v2183 = vld [vmem:[%s9 + $0x34] sm:$0xf]
    %v2184 = vld [vmem:[%s9 + $0x38] sm:$0xf]
    %v2185 = vld [vmem:[%s9 + $0x3c] sm:$0xf]
    %v2186 = vld [vmem:[%s9 + $0x40] sm:$0xf]
    %v2187 = vld [vmem:[%s9 + $0x44] sm:$0xf]
    %v2188 = vld [vmem:[%s9 + $0x48] sm:$0xf]
    %v2189 = vld [vmem:[%s9 + $0x4c] sm:$0xf]
    %v2190 = vld [vmem:[%s9 + $0x50] sm:$0xf]
    %v2191 = vld [vmem:[%s9 + $0x54] sm:$0xf]
    %v2192 = vld [vmem:[%s9 + $0x58] sm:$0xf]
    %v2193 = vld [vmem:[%s9 + $0x5c] sm:$0xf]
    %v2194 = vld [vmem:[%s9 + $0x60] sm:$0xf]
    %v2195 = vld [vmem:[%s9 + $0x64] sm:$0xf]
    %v2196 = vld [vmem:[%s9 + $0x68] sm:$0xf]
    %v2197 = vld [vmem:[%s9 + $0x6c] sm:$0xf]
    %v2198 = vld [vmem:[%s9 + $0x70] sm:$0xf]
    %v2199 = vld [vmem:[%s9 + $0x74] sm:$0xf]
    %v2200 = vld [vmem:[%s9 + $0x78] sm:$0xf]
    %v2201 = vld [vmem:[%s9 + $0x7c] sm:$0xf]
    %v2202 = vld [vmem:[%s10] sm:$0x1]
    %v2204 = vperm.slane %v2202, 0
    %v2238 = vunpack.c.l.b16 %v2170
    %v2239 = vunpack.c.l.b16 %v2171
    %v2240 = vunpack.c.l.b16 %v2172
    %v2241 = vunpack.c.l.b16 %v2173
    %v2242 = vunpack.c.l.b16 %v2174
    %v2243 = vunpack.c.l.b16 %v2175
    %v2244 = vunpack.c.l.b16 %v2176
    %v2245 = vunpack.c.l.b16 %v2177
    %v2246 = vunpack.c.l.b16 %v2178
    %v2247 = vunpack.c.l.b16 %v2179
    %v2248 = vunpack.c.l.b16 %v2180
    %v2249 = vunpack.c.l.b16 %v2181
    %v2250 = vunpack.c.l.b16 %v2182
    %v2251 = vunpack.c.l.b16 %v2183
    %v2252 = vunpack.c.l.b16 %v2184
    %v2253 = vunpack.c.l.b16 %v2185
    %v2254 = vunpack.c.l.b16 %v2186
    %v2255 = vunpack.c.l.b16 %v2187
    %v2256 = vunpack.c.l.b16 %v2188
    %v2257 = vunpack.c.l.b16 %v2189
    %v2258 = vunpack.c.l.b16 %v2190
    %v2259 = vunpack.c.l.b16 %v2191
    %v2260 = vunpack.c.l.b16 %v2192
    %v2261 = vunpack.c.l.b16 %v2193
    %v2262 = vunpack.c.l.b16 %v2194
    %v2263 = vunpack.c.l.b16 %v2195
    %v2264 = vunpack.c.l.b16 %v2196
    %v2265 = vunpack.c.l.b16 %v2197
    %v2266 = vunpack.c.l.b16 %v2198
    %v2267 = vunpack.c.l.b16 %v2199
    %v2268 = vunpack.c.l.b16 %v2200
    %v2269 = vunpack.c.l.b16 %v2201
    %v2270 = vpack.c.b16 %v2239, %v2238
    %v2271 = vpack.c.b16 %v2241, %v2240
    %v2272 = vpack.c.b16 %v2243, %v2242
    %v2273 = vpack.c.b16 %v2245, %v2244
    %v2274 = vpack.c.b16 %v2247, %v2246
    %v2275 = vpack.c.b16 %v2249, %v2248
    %v2276 = vpack.c.b16 %v2251, %v2250
    %v2277 = vpack.c.b16 %v2253, %v2252
    %v2278 = vpack.c.b16 %v2255, %v2254
    %v2279 = vpack.c.b16 %v2257, %v2256
    %v2280 = vpack.c.b16 %v2259, %v2258
    %v2281 = vpack.c.b16 %v2261, %v2260
    %v2282 = vpack.c.b16 %v2263, %v2262
    %v2283 = vpack.c.b16 %v2265, %v2264
    %v2284 = vpack.c.b16 %v2267, %v2266
    %v2285 = vpack.c.b16 %v2269, %v2268
    %2302 = vmatpush.bf16.msra.mxu0 %v2277
    %2303 = vmatpush.bf16.msra.mxu0 %v2276
    %2304 = vmatpush.bf16.msra.mxu0 %v2275
    %2305 = vmatpush.bf16.msra.mxu0 %v2274
    %2306 = vmatpush.bf16.msra.mxu0 %v2273
    %2307 = vmatpush.bf16.msra.mxu0 %v2272
    %2308 = vmatpush.bf16.msra.mxu0 %v2271
    %2309 = vmatpush.bf16.msra.mxu0 %v2270
    %2310 = vmatmul.bf16.gmra.mxu0 %v2168
    %v2311 = vpop.f32.mrf.mxu0
    %v2312 = vadd.f32 %v2204, %v2311
    %v2313 = vpop.f32.mrf.mxu0
    %2314 = vdwg.mxu0
    %2315 = vmatpush.bf16.msra.mxu0 %v2285
    %2316 = vmatpush.bf16.msra.mxu0 %v2284
    %2317 = vmatpush.bf16.msra.mxu0 %v2283
    %2318 = vmatpush.bf16.msra.mxu0 %v2282
    %2319 = vmatpush.bf16.msra.mxu0 %v2281
    %2320 = vmatpush.bf16.msra.mxu0 %v2280
    %2321 = vmatpush.bf16.msra.mxu0 %v2279
    %2322 = vmatpush.bf16.msra.mxu0 %v2278
    %2323 = vmatmul.bf16.gmra.mxu0 %v2169
    %v2324 = vpop.f32.mrf.mxu0
    %v2325 = vadd.f32 %v2312, %v2324
    %v2326 = vpop.f32.mrf.mxu0
    %2327 = vdwg.mxu0
    %2328 = vst [vmem:[#allocation2] sm:$0xff] %v2325
    // Predicated region
    $region46: #{densenet_forward.1} parent=1 // pred_check
      _
    $region47: #{densenet_forward.1} parent=1 // pred_check_branch
      %2330 = sbr.rel (0) target = $region49
    $region48: #{densenet_forward.1} parent=1 // pred_region
      %2332 = vsyncadd [#allocation3], 0
      %s2334 = sshll.u32 [#allocation2], 4
      %s2335 = int_to_ptr.vmem [resolvable:$true] %s2334
      %s2336 = sshll.u32 %s11, 4
      %s2337 = int_to_ptr.hbm [resolvable:$true] %s2336
      %2339 = dma.vmem_to_hbm [thread:$0]  %s2335, 128, %s2337, [#allocation3]
    $region49: #{densenet_forward.1} parent=1 // pred_fallthru
      _
    // Predicated region
    $region50: #{densenet_forward.1} parent=1 // pred_check
      _
    $region51: #{densenet_forward.1} parent=1 // pred_check_branch
      %2341 = sbr.rel (0) target = $region53
    $region52: #{densenet_forward.1} parent=1 // pred_region
      %2343 = dma.done [#allocation3], 128
    $region53: #{densenet_forward.1} parent=1 // pred_fallthru
      _
    %2344 = vsyncpa [#allocation3], 1

</llo_original>
